<compile_context>
chip_gen: v7x
topology: tpu7x:2x2x1
jax: 0.10.0
libtpu: 0.0.40
codegen_flags: <defaults>
</compile_context>

<pallas_src>
import numpy as np
import jax
import jax.numpy as jnp
from jax import lax
from jax.experimental import pallas as pl
from jax.experimental.pallas import tpu as pltpu


def _round_up(x, m):
    return (x + m - 1) // m * m


def _choose_tile_n(outfeatures, requested=512):
    # requested must be 128 * 2^k; shrink until the tile fits and (if possible)
    # there are >= 2 output tiles so the "parallel" axis feeds both v7x cores.
    assert requested % 128 == 0 and (requested // 128) & ((requested // 128) - 1) == 0
    t = requested
    while t > 128 and (t > _round_up(outfeatures, 128)
                       or _round_up(outfeatures, t) // t < 2):
        t //= 2
    return max(t, 128)


def quant3_matvec_kernel(xsum_ref, x_ref, qw_ref, scales_ref, zeros_ref, bias_ref,
                         o_ref, w_scr):
    """One (OUT tile, K panel) grid step.

    xsum_ref : (1,)                 f32  SMEM   sum(x) for the factored zero-point term
    x_ref    : (8, KPANEL)          bf16 VMEM   rows 0..2 = bf16x3 split of x (permuted), 3..7 = 0
    qw_ref   : (3, PGROUPS, TILE_N) i32  VMEM   packed 3-bit weights, one panel / out tile
    scales_ref / zeros_ref / bias_ref / o_ref : (1, TILE_N) f32
    w_scr    : (256, TILE_N)        bf16 VMEM   dequantized MXU RHS for one 8-group sub-block
    """
    k = pl.program_id(1)

    @pl.when(k == 0)
    def _init():
        o_ref[...] = jnp.zeros_like(o_ref)

    n_sub = qw_ref.shape[1] // 8          # 8 groups (= 256 inputs) per sub-block
    tile_n = o_ref.shape[1]

    def sub_body(sub, acc):
        row = pl.multiple_of(sub * 8, 8)
        q0 = qw_ref[0, pl.ds(row, 8), :]  # (8, TILE_N) int32
        q1 = qw_ref[1, pl.ds(row, 8), :]
        q2 = qw_ref[2, pl.ds(row, 8), :]

        def slab(s):
            # int3 weight values for input offset s within the 32-wide group.
            # (masks after arithmetic right shifts are required -- keep them)
            if s < 10:
                return (q0 >> (3 * s)) & 7
            if s == 10:
                return ((q0 >> 30) & 3) | ((q1 & 1) << 2)
            if s < 21:
                return (q1 >> (3 * (s - 11) + 1)) & 7
            if s == 21:
                return ((q1 >> 31) & 1) | ((q2 & 3) << 1)
            return (q2 >> (3 * (s - 22) + 2)) & 7

        # Dequantize 32 * 8 = 256 input rows into the bf16 scratch, two (8, TILE_N)
        # slabs per store so every store is a full, aligned 16-sublane bf16 tile.
        for s in range(0, 32, 2):
            pair = jnp.concatenate([slab(s), slab(s + 1)], axis=0)      # (16, TILE_N) i32
            w_scr[s * 8:(s + 2) * 8, :] = pair.astype(jnp.float32).astype(jnp.bfloat16)

        # MXU contraction: rows 0..2 of x_sub hold a hi/mid/lo bf16 decomposition
        # of the f32 activations (weights are exact in bf16), so the f32 result is
        # accurate to ~2^-24 relative while staying on the bf16-only MXU path.
        xoff = pl.multiple_of(sub * 256, 256)
        x_sub = x_ref[:, pl.ds(xoff, 256)]                               # (8, 256) bf16
        part = jnp.dot(x_sub, w_scr[...],
                       preferred_element_type=jnp.float32)               # (8, TILE_N) f32
        return acc + (part[0:1, :] + part[1:2, :] + part[2:3, :])

    acc = lax.fori_loop(0, n_sub, sub_body,
                        jnp.zeros((1, tile_n), jnp.float32), unroll=2)
    o_ref[...] += acc

    @pl.when(k == pl.num_programs(1) - 1)
    def _finalize():
        o_ref[...] = (bias_ref[...] + scales_ref[...] * o_ref[...]
                      - xsum_ref[0] * zeros_ref[...])


def prepare_quant3_params(qweight, scales, zeros, bias, *, tile_n=512, panel_groups=64):
    """One-time weight layout prep (pad + retile) so the per-call path is copy-free."""
    packed_rows, outfeatures = qweight.shape
    if packed_rows % 3 != 0:
        raise ValueError("qweight rows must be a multiple of 3")
    n_groups = packed_rows // 3
    infeatures = n_groups * 32

    tile_n = _choose_tile_n(outfeatures, tile_n)
    out_p = _round_up(outfeatures, tile_n)

    pg = max(8, min(panel_groups, _round_up(n_groups, 8)))   # groups per K panel
    pg = _round_up(pg, 8)
    n_groups_p = _round_up(n_groups, pg)
    n_panels = n_groups_p // pg

    qw = jnp.asarray(qweight, jnp.int32)
    qw = jnp.pad(qw, ((0, 3 * (n_groups_p - n_groups)), (0, out_p - outfeatures)))
    # (group, 3, OUT) -> (panel, 3, group-in-panel, OUT): the kernel then reads
    # dense (8, TILE_N) slabs per packed-row class.
    qw = qw.reshape(n_panels, pg, 3, out_p).transpose(0, 2, 1, 3)

    def as_row(v):
        v = jnp.asarray(v, jnp.float32).reshape(-1)
        if v.shape[0] != outfeatures:
            raise ValueError("per-output parameter has wrong length")
        return jnp.pad(v, (0, out_p - outfeatures)).reshape(1, out_p)

    return dict(
        qw=qw, scales=as_row(scales), zeros=as_row(zeros), bias=as_row(bias),
        infeatures=infeatures, outfeatures=outfeatures, out_p=out_p,
        tile_n=tile_n, panel_groups=pg, n_panels=n_panels, n_groups_p=n_groups_p)


def quant3_linear_forward(x, params):
    """Matches Quant3Linear.forward for the single-token (x.numel()==x.shape[-1]) case."""
    if int(np.prod(x.shape)) != x.shape[-1]:
        raise ValueError("Only supports a single token currently.")
    infeatures = params["infeatures"]
    if x.shape[-1] != infeatures:
        raise ValueError("input feature mismatch")
    dtype = x.dtype

    pg = params["panel_groups"]
    n_panels = params["n_panels"]
    tile_n = params["tile_n"]
    out_p = params["out_p"]
    kpanel = pg * 32
    in_p = params["n_groups_p"] * 32

    # faster=False path: compute in float.
    xf = x.reshape(infeatures).astype(jnp.float32)
    xsum = jnp.sum(xf).reshape(1)

    # Permute x to the dequant-scratch row order (offset-major within each 8-group
    # sub-block) and split into a bf16x3 (hi/mid/lo) MXU LHS; rows 3..7 are zero
    # padding so the LHS is a full 8-sublane operand.
    xp = jnp.pad(xf, (0, in_p - infeatures))
    xp = xp.reshape(n_panels, pg // 8, 8, 32).transpose(0, 1, 3, 2).reshape(n_panels, kpanel)
    x0 = xp.astype(jnp.bfloat16)
    r1 = xp - x0.astype(jnp.float32)
    x1 = r1.astype(jnp.bfloat16)
    x2 = (r1 - x1.astype(jnp.float32)).astype(jnp.bfloat16)
    pad_rows = jnp.zeros((n_panels, 5, kpanel), jnp.bfloat16)
    x_blk = jnp.concatenate([x0[:, None, :], x1[:, None, :], x2[:, None, :], pad_rows],
                            axis=1)                                    # (n_panels, 8, KPANEL)

    n_out_tiles = out_p // tile_n
    packed_bytes = 3 * (in_p // 32) * out_p * 4

    out = pl.pallas_call(
        quant3_matvec_kernel,
        out_shape=jax.ShapeDtypeStruct((1, out_p), jnp.float32),
        grid=(n_out_tiles, n_panels),
        in_specs=[
            pl.BlockSpec(memory_space=pltpu.MemorySpace.SMEM),                 # sum(x)
            pl.BlockSpec((None, 8, kpanel), lambda o, k: (k, 0, 0)),           # x (bf16x3)
            pl.BlockSpec((None, 3, pg, tile_n), lambda o, k: (k, 0, 0, o)),    # packed weights
            pl.BlockSpec((1, tile_n), lambda o, k: (0, o)),                    # scales
            pl.BlockSpec((1, tile_n), lambda o, k: (0, o)),                    # zeros
            pl.BlockSpec((1, tile_n), lambda o, k: (0, o)),                    # bias
        ],
        out_specs=pl.BlockSpec((1, tile_n), lambda o, k: (0, o)),
        scratch_shapes=[pltpu.VMEM((256, tile_n), jnp.bfloat16)],
        compiler_params=pltpu.CompilerParams(
            dimension_semantics=("parallel", "arbitrary"),
            vmem_limit_bytes=32 * 1024 * 1024),
        cost_estimate=pl.CostEstimate(
            flops=2 * 3 * in_p * out_p,
            transcendentals=0,
            bytes_accessed=int(packed_bytes + in_p * 4 + 4 * out_p * 4)),
    )(xsum, x_blk, params["qw"], params["scales"], params["zeros"], params["bias"])

    y = out.reshape(out_p)[: params["outfeatures"]]
    outshape = list(x.shape)
    outshape[-1] = params["outfeatures"]
    return y.astype(dtype).reshape(outshape)


def pack_qweight(intweight_in_out):
    """Host-side replica of Quant3Linear.pack bit packing (glue, not the hot path).

    intweight_in_out: (infeatures, outfeatures) ints in [0, 8).
    Returns (infeatures // 32 * 3, outfeatures) int32.
    """
    intw = intweight_in_out.astype(np.uint64)
    rows = intw.shape[0] // 32 * 3
    qweight = np.zeros((rows, intw.shape[1]), dtype=np.uint64)
    i = 0
    row = 0
    while row < rows:
        for j in range(i, i + 10):
            qweight[row] |= intw[j] << (3 * (j - i))
        i += 10
        qweight[row] |= intw[i] << 30
        row += 1
        qweight[row] |= (intw[i] >> 2) & 1
        i += 1
        for j in range(i, i + 10):
            qweight[row] |= intw[j] << (3 * (j - i) + 1)
        i += 10
        qweight[row] |= intw[i] << 31
        row += 1
        qweight[row] |= (intw[i] >> 1) & 3
        i += 1
        for j in range(i, i + 10):
            qweight[row] |= intw[j] << (3 * (j - i) + 2)
        i += 10
        row += 1
    qweight &= np.uint64(0xFFFFFFFF)
    return qweight.astype(np.uint32).view(np.int32)


if __name__ == "__main__":
    IN, OUT = 512, 2048  # IN must be a multiple of 32; OUT/IN padding handled internally

    key = jax.random.PRNGKey(0)
    k1, k2, k3, k4, k5 = jax.random.split(key, 5)

    # Deterministic synthetic "checkpoint": 3-bit int weights + scales/zeros/bias.
    intweight = jax.random.randint(k1, (IN, OUT), 0, 8, dtype=jnp.int32)          # (in, out)
    scales = jax.random.uniform(k2, (OUT, 1), minval=0.5, maxval=1.5,
                                dtype=jnp.float32)                                # (out, 1)
    zeros_q = jax.random.randint(k3, (OUT, 1), 0, 8, dtype=jnp.int32).astype(jnp.float32)
    zeros_buf = zeros_q * scales          # matches pack(): self.zeros = zeros * scales
    bias = jax.random.normal(k4, (OUT,), dtype=jnp.float32)
    x = jax.random.normal(k5, (1, IN), dtype=jnp.float32)   # single token: numel == last dim

    qweight = jnp.asarray(pack_qweight(np.asarray(intweight)))  # (IN//32*3, OUT) int32

    # One-time layout prep (padding / retiling of weights happens here, not per call).
    params = prepare_quant3_params(qweight, scales, zeros_buf, bias)

    y = quant3_linear_forward(x, params)
    y = jax.block_until_ready(y)

    # Pure-numpy reference of the dequantized mat-vec (float64 accumulate).
    W_deq = (np.asarray(intweight, np.float64)
             * np.asarray(scales, np.float64).reshape(1, OUT)
             - np.asarray(zeros_buf, np.float64).reshape(1, OUT))
    y_ref = np.asarray(bias, np.float64) + np.asarray(x, np.float64) @ W_deq

    # bf16x3 MXU path + factored scales/zeros -> ~f32 accuracy; keep a small margin.
    assert np.allclose(np.asarray(y, np.float64), y_ref, rtol=5e-4, atol=5e-4), \
        "Pallas quant3 matvec mismatch vs reference"
    # TODO(synk): the `faster=True` half-precision quant_cuda path is not implemented
    # (only the float vecquant3matmul semantics are reproduced).
    print("KERNEL_OK")
</pallas_src>

<mosaic_0001>
module attributes {stable_mosaic.version = 11 : i64} {
  func.func @quant3_matvec_kernel(%arg0: i32, %arg1: i32, %arg2: memref<1xf32, #tpu.memory_space<smem>>, %arg3: memref<1x8x512xbf16, #tpu.memory_space<vmem>>, %arg4: memref<1x3x16x512xi32, #tpu.memory_space<vmem>>, %arg5: memref<1x512xf32, #tpu.memory_space<vmem>>, %arg6: memref<1x512xf32, #tpu.memory_space<vmem>>, %arg7: memref<1x512xf32, #tpu.memory_space<vmem>>, %arg8: memref<1x512xf32, #tpu.memory_space<vmem>>, %arg9: memref<256x512xbf16, #tpu.memory_space<vmem>>) attributes {dimension_semantics = [#tpu.dimension_semantics<parallel>, #tpu.dimension_semantics<arbitrary>], iteration_bounds = array<i64: 4, 1>, scalar_prefetch = 0 : i64, scratch_operands = 1 : i64, tpu.core_type = #tpu.core_type<tc>, window_params = [{transform_indices = @transform_0, window_bounds = array<i64: 1>}, {transform_indices = @transform_1, window_bounds = array<i64: 1, 8, 512>}, {transform_indices = @transform_2, window_bounds = array<i64: 1, 3, 16, 512>}, {transform_indices = @transform_3, window_bounds = array<i64: 1, 512>}, {transform_indices = @transform_4, window_bounds = array<i64: 1, 512>}, {transform_indices = @transform_5, window_bounds = array<i64: 1, 512>}, {transform_indices = @transform_6, window_bounds = array<i64: 1, 512>}]} {
    %c0_i32 = arith.constant 0 : i32
    %0 = arith.cmpi eq, %arg1, %c0_i32 : i32
    %1 = arith.extui %0 : i1 to i32
    %c0_i32_0 = arith.constant 0 : i32
    %2 = arith.cmpi ne, %1, %c0_i32_0 : i32
    scf.if %2 {
      %cst_192 = arith.constant 0.000000e+00 : f32
      %462 = vector.broadcast %cst_192 : f32 to vector<1x512xf32>
      %c0_193 = arith.constant 0 : index
      %c0_194 = arith.constant 0 : index
      %463 = vector.load %arg8[%c0_193, %c0_194] : memref<1x512xf32, #tpu.memory_space<vmem>>, vector<1x512xf32>
      tpu.vector_store %arg8[%c0_193, %c0_194], %462 {strides = array<i32>} : memref<1x512xf32, #tpu.memory_space<vmem>>, vector<1x512xf32>,
    } else {
    }
    %cst = arith.constant 0.000000e+00 : f32
    %3 = vector.broadcast %cst : f32 to vector<1x512xf32>
    %c0_i32_1 = arith.constant 0 : i32
    %c8_i32 = arith.constant 8 : i32
    %4 = arith.muli %c0_i32_1, %c8_i32 : i32
    %5 = tpu.assume_multiple %4, 8 : i32
    %c0 = arith.constant 0 : index
    %c0_2 = arith.constant 0 : index
    %6 = arith.index_cast %5 : i32 to index
    %c0_3 = arith.constant 0 : index
    %7 = vector.load %arg4[%c0, %c0_2, %6, %c0_3] : memref<1x3x16x512xi32, #tpu.memory_space<vmem>>, vector<1x1x8x512xi32>
    %8 = vector.shape_cast %7 : vector<1x1x8x512xi32> to vector<8x512xi32>
    %c0_4 = arith.constant 0 : index
    %c1 = arith.constant 1 : index
    %9 = arith.index_cast %5 : i32 to index
    %c0_5 = arith.constant 0 : index
    %10 = vector.load %arg4[%c0_4, %c1, %9, %c0_5] : memref<1x3x16x512xi32, #tpu.memory_space<vmem>>, vector<1x1x8x512xi32>
    %11 = vector.shape_cast %10 : vector<1x1x8x512xi32> to vector<8x512xi32>
    %c0_6 = arith.constant 0 : index
    %c2 = arith.constant 2 : index
    %12 = arith.index_cast %5 : i32 to index
    %c0_7 = arith.constant 0 : index
    %13 = vector.load %arg4[%c0_6, %c2, %12, %c0_7] : memref<1x3x16x512xi32, #tpu.memory_space<vmem>>, vector<1x1x8x512xi32>
    %14 = vector.shape_cast %13 : vector<1x1x8x512xi32> to vector<8x512xi32>
    %c0_i32_8 = arith.constant 0 : i32
    %15 = vector.broadcast %c0_i32_8 : i32 to vector<8x512xi32>
    %16 = arith.shrsi %8, %15 : vector<8x512xi32>
    %c7_i32 = arith.constant 7 : i32
    %17 = vector.broadcast %c7_i32 : i32 to vector<8x512xi32>
    %18 = arith.andi %16, %17 : vector<8x512xi32>
    %c3_i32 = arith.constant 3 : i32
    %19 = vector.broadcast %c3_i32 : i32 to vector<8x512xi32>
    %20 = arith.shrsi %8, %19 : vector<8x512xi32>
    %c7_i32_9 = arith.constant 7 : i32
    %21 = vector.broadcast %c7_i32_9 : i32 to vector<8x512xi32>
    %22 = arith.andi %20, %21 : vector<8x512xi32>
    %23 = tpu.concatenate %18, %22 in 0 : vector<8x512xi32>, vector<8x512xi32> -> vector<16x512xi32>
    %24 = arith.sitofp %23 : vector<16x512xi32> to vector<16x512xf32>
    %25 = arith.truncf %24 : vector<16x512xf32> to vector<16x512xbf16>
    %c0_10 = arith.constant 0 : index
    %c0_11 = arith.constant 0 : index
    %26 = vector.load %arg9[%c0_10, %c0_11] : memref<256x512xbf16, #tpu.memory_space<vmem>>, vector<16x512xbf16>
    tpu.vector_store %arg9[%c0_10, %c0_11], %25 {strides = array<i32>} : memref<256x512xbf16, #tpu.memory_space<vmem>>, vector<16x512xbf16>,
    %c6_i32 = arith.constant 6 : i32
    %27 = vector.broadcast %c6_i32 : i32 to vector<8x512xi32>
    %28 = arith.shrsi %8, %27 : vector<8x512xi32>
    %c7_i32_12 = arith.constant 7 : i32
    %29 = vector.broadcast %c7_i32_12 : i32 to vector<8x512xi32>
    %30 = arith.andi %28, %29 : vector<8x512xi32>
    %c9_i32 = arith.constant 9 : i32
    %31 = vector.broadcast %c9_i32 : i32 to vector<8x512xi32>
    %32 = arith.shrsi %8, %31 : vector<8x512xi32>
    %c7_i32_13 = arith.constant 7 : i32
    %33 = vector.broadcast %c7_i32_13 : i32 to vector<8x512xi32>
    %34 = arith.andi %32, %33 : vector<8x512xi32>
    %35 = tpu.concatenate %30, %34 in 0 : vector<8x512xi32>, vector<8x512xi32> -> vector<16x512xi32>
    %36 = arith.sitofp %35 : vector<16x512xi32> to vector<16x512xf32>
    %37 = arith.truncf %36 : vector<16x512xf32> to vector<16x512xbf16>
    %c16 = arith.constant 16 : index
    %c0_14 = arith.constant 0 : index
    %38 = vector.load %arg9[%c16, %c0_14] : memref<256x512xbf16, #tpu.memory_space<vmem>>, vector<16x512xbf16>
    tpu.vector_store %arg9[%c16, %c0_14], %37 {strides = array<i32>} : memref<256x512xbf16, #tpu.memory_space<vmem>>, vector<16x512xbf16>,
    %c12_i32 = arith.constant 12 : i32
    %39 = vector.broadcast %c12_i32 : i32 to vector<8x512xi32>
    %40 = arith.shrsi %8, %39 : vector<8x512xi32>
    %c7_i32_15 = arith.constant 7 : i32
    %41 = vector.broadcast %c7_i32_15 : i32 to vector<8x512xi32>
    %42 = arith.andi %40, %41 : vector<8x512xi32>
    %c15_i32 = arith.constant 15 : i32
    %43 = vector.broadcast %c15_i32 : i32 to vector<8x512xi32>
    %44 = arith.shrsi %8, %43 : vector<8x512xi32>
    %c7_i32_16 = arith.constant 7 : i32
    %45 = vector.broadcast %c7_i32_16 : i32 to vector<8x512xi32>
    %46 = arith.andi %44, %45 : vector<8x512xi32>
    %47 = tpu.concatenate %42, %46 in 0 : vector<8x512xi32>, vector<8x512xi32> -> vector<16x512xi32>
    %48 = arith.sitofp %47 : vector<16x512xi32> to vector<16x512xf32>
    %49 = arith.truncf %48 : vector<16x512xf32> to vector<16x512xbf16>
    %c32 = arith.constant 32 : index
    %c0_17 = arith.constant 0 : index
    %50 = vector.load %arg9[%c32, %c0_17] : memref<256x512xbf16, #tpu.memory_space<vmem>>, vector<16x512xbf16>
    tpu.vector_store %arg9[%c32, %c0_17], %49 {strides = array<i32>} : memref<256x512xbf16, #tpu.memory_space<vmem>>, vector<16x512xbf16>,
    %c18_i32 = arith.constant 18 : i32
    %51 = vector.broadcast %c18_i32 : i32 to vector<8x512xi32>
    %52 = arith.shrsi %8, %51 : vector<8x512xi32>
    %c7_i32_18 = arith.constant 7 : i32
    %53 = vector.broadcast %c7_i32_18 : i32 to vector<8x512xi32>
    %54 = arith.andi %52, %53 : vector<8x512xi32>
    %c21_i32 = arith.constant 21 : i32
    %55 = vector.broadcast %c21_i32 : i32 to vector<8x512xi32>
    %56 = arith.shrsi %8, %55 : vector<8x512xi32>
    %c7_i32_19 = arith.constant 7 : i32
    %57 = vector.broadcast %c7_i32_19 : i32 to vector<8x512xi32>
    %58 = arith.andi %56, %57 : vector<8x512xi32>
    %59 = tpu.concatenate %54, %58 in 0 : vector<8x512xi32>, vector<8x512xi32> -> vector<16x512xi32>
    %60 = arith.sitofp %59 : vector<16x512xi32> to vector<16x512xf32>
    %61 = arith.truncf %60 : vector<16x512xf32> to vector<16x512xbf16>
    %c48 = arith.constant 48 : index
    %c0_20 = arith.constant 0 : index
    %62 = vector.load %arg9[%c48, %c0_20] : memref<256x512xbf16, #tpu.memory_space<vmem>>, vector<16x512xbf16>
    tpu.vector_store %arg9[%c48, %c0_20], %61 {strides = array<i32>} : memref<256x512xbf16, #tpu.memory_space<vmem>>, vector<16x512xbf16>,
    %c24_i32 = arith.constant 24 : i32
    %63 = vector.broadcast %c24_i32 : i32 to vector<8x512xi32>
    %64 = arith.shrsi %8, %63 : vector<8x512xi32>
    %c7_i32_21 = arith.constant 7 : i32
    %65 = vector.broadcast %c7_i32_21 : i32 to vector<8x512xi32>
    %66 = arith.andi %64, %65 : vector<8x512xi32>
    %c27_i32 = arith.constant 27 : i32
    %67 = vector.broadcast %c27_i32 : i32 to vector<8x512xi32>
    %68 = arith.shrsi %8, %67 : vector<8x512xi32>
    %c7_i32_22 = arith.constant 7 : i32
    %69 = vector.broadcast %c7_i32_22 : i32 to vector<8x512xi32>
    %70 = arith.andi %68, %69 : vector<8x512xi32>
    %71 = tpu.concatenate %66, %70 in 0 : vector<8x512xi32>, vector<8x512xi32> -> vector<16x512xi32>
    %72 = arith.sitofp %71 : vector<16x512xi32> to vector<16x512xf32>
    %73 = arith.truncf %72 : vector<16x512xf32> to vector<16x512xbf16>
    %c64 = arith.constant 64 : index
    %c0_23 = arith.constant 0 : index
    %74 = vector.load %arg9[%c64, %c0_23] : memref<256x512xbf16, #tpu.memory_space<vmem>>, vector<16x512xbf16>
    tpu.vector_store %arg9[%c64, %c0_23], %73 {strides = array<i32>} : memref<256x512xbf16, #tpu.memory_space<vmem>>, vector<16x512xbf16>,
    %c30_i32 = arith.constant 30 : i32
    %75 = vector.broadcast %c30_i32 : i32 to vector<8x512xi32>
    %76 = arith.shrsi %8, %75 : vector<8x512xi32>
    %c3_i32_24 = arith.constant 3 : i32
    %77 = vector.broadcast %c3_i32_24 : i32 to vector<8x512xi32>
    %78 = arith.andi %76, %77 : vector<8x512xi32>
    %c1_i32 = arith.constant 1 : i32
    %79 = vector.broadcast %c1_i32 : i32 to vector<8x512xi32>
    %80 = arith.andi %11, %79 : vector<8x512xi32>
    %c2_i32 = arith.constant 2 : i32
    %81 = vector.broadcast %c2_i32 : i32 to vector<8x512xi32>
    %82 = arith.shli %80, %81 : vector<8x512xi32>
    %83 = arith.ori %78, %82 : vector<8x512xi32>
    %c1_i32_25 = arith.constant 1 : i32
    %84 = vector.broadcast %c1_i32_25 : i32 to vector<8x512xi32>
    %85 = arith.shrsi %11, %84 : vector<8x512xi32>
    %c7_i32_26 = arith.constant 7 : i32
    %86 = vector.broadcast %c7_i32_26 : i32 to vector<8x512xi32>
    %87 = arith.andi %85, %86 : vector<8x512xi32>
    %88 = tpu.concatenate %83, %87 in 0 : vector<8x512xi32>, vector<8x512xi32> -> vector<16x512xi32>
    %89 = arith.sitofp %88 : vector<16x512xi32> to vector<16x512xf32>
    %90 = arith.truncf %89 : vector<16x512xf32> to vector<16x512xbf16>
    %c80 = arith.constant 80 : index
    %c0_27 = arith.constant 0 : index
    %91 = vector.load %arg9[%c80, %c0_27] : memref<256x512xbf16, #tpu.memory_space<vmem>>, vector<16x512xbf16>
    tpu.vector_store %arg9[%c80, %c0_27], %90 {strides = array<i32>} : memref<256x512xbf16, #tpu.memory_space<vmem>>, vector<16x512xbf16>,
    %c4_i32 = arith.constant 4 : i32
    %92 = vector.broadcast %c4_i32 : i32 to vector<8x512xi32>
    %93 = arith.shrsi %11, %92 : vector<8x512xi32>
    %c7_i32_28 = arith.constant 7 : i32
    %94 = vector.broadcast %c7_i32_28 : i32 to vector<8x512xi32>
    %95 = arith.andi %93, %94 : vector<8x512xi32>
    %c7_i32_29 = arith.constant 7 : i32
    %96 = vector.broadcast %c7_i32_29 : i32 to vector<8x512xi32>
    %97 = arith.shrsi %11, %96 : vector<8x512xi32>
    %c7_i32_30 = arith.constant 7 : i32
    %98 = vector.broadcast %c7_i32_30 : i32 to vector<8x512xi32>
    %99 = arith.andi %97, %98 : vector<8x512xi32>
    %100 = tpu.concatenate %95, %99 in 0 : vector<8x512xi32>, vector<8x512xi32> -> vector<16x512xi32>
    %101 = arith.sitofp %100 : vector<16x512xi32> to vector<16x512xf32>
    %102 = arith.truncf %101 : vector<16x512xf32> to vector<16x512xbf16>
    %c96 = arith.constant 96 : index
    %c0_31 = arith.constant 0 : index
    %103 = vector.load %arg9[%c96, %c0_31] : memref<256x512xbf16, #tpu.memory_space<vmem>>, vector<16x512xbf16>
    tpu.vector_store %arg9[%c96, %c0_31], %102 {strides = array<i32>} : memref<256x512xbf16, #tpu.memory_space<vmem>>, vector<16x512xbf16>,
    %c10_i32 = arith.constant 10 : i32
    %104 = vector.broadcast %c10_i32 : i32 to vector<8x512xi32>
    %105 = arith.shrsi %11, %104 : vector<8x512xi32>
    %c7_i32_32 = arith.constant 7 : i32
    %106 = vector.broadcast %c7_i32_32 : i32 to vector<8x512xi32>
    %107 = arith.andi %105, %106 : vector<8x512xi32>
    %c13_i32 = arith.constant 13 : i32
    %108 = vector.broadcast %c13_i32 : i32 to vector<8x512xi32>
    %109 = arith.shrsi %11, %108 : vector<8x512xi32>
    %c7_i32_33 = arith.constant 7 : i32
    %110 = vector.broadcast %c7_i32_33 : i32 to vector<8x512xi32>
    %111 = arith.andi %109, %110 : vector<8x512xi32>
    %112 = tpu.concatenate %107, %111 in 0 : vector<8x512xi32>, vector<8x512xi32> -> vector<16x512xi32>
    %113 = arith.sitofp %112 : vector<16x512xi32> to vector<16x512xf32>
    %114 = arith.truncf %113 : vector<16x512xf32> to vector<16x512xbf16>
    %c112 = arith.constant 112 : index
    %c0_34 = arith.constant 0 : index
    %115 = vector.load %arg9[%c112, %c0_34] : memref<256x512xbf16, #tpu.memory_space<vmem>>, vector<16x512xbf16>
    tpu.vector_store %arg9[%c112, %c0_34], %114 {strides = array<i32>} : memref<256x512xbf16, #tpu.memory_space<vmem>>, vector<16x512xbf16>,
    %c16_i32 = arith.constant 16 : i32
    %116 = vector.broadcast %c16_i32 : i32 to vector<8x512xi32>
    %117 = arith.shrsi %11, %116 : vector<8x512xi32>
    %c7_i32_35 = arith.constant 7 : i32
    %118 = vector.broadcast %c7_i32_35 : i32 to vector<8x512xi32>
    %119 = arith.andi %117, %118 : vector<8x512xi32>
    %c19_i32 = arith.constant 19 : i32
    %120 = vector.broadcast %c19_i32 : i32 to vector<8x512xi32>
    %121 = arith.shrsi %11, %120 : vector<8x512xi32>
    %c7_i32_36 = arith.constant 7 : i32
    %122 = vector.broadcast %c7_i32_36 : i32 to vector<8x512xi32>
    %123 = arith.andi %121, %122 : vector<8x512xi32>
    %124 = tpu.concatenate %119, %123 in 0 : vector<8x512xi32>, vector<8x512xi32> -> vector<16x512xi32>
    %125 = arith.sitofp %124 : vector<16x512xi32> to vector<16x512xf32>
    %126 = arith.truncf %125 : vector<16x512xf32> to vector<16x512xbf16>
    %c128 = arith.constant 128 : index
    %c0_37 = arith.constant 0 : index
    %127 = vector.load %arg9[%c128, %c0_37] : memref<256x512xbf16, #tpu.memory_space<vmem>>, vector<16x512xbf16>
    tpu.vector_store %arg9[%c128, %c0_37], %126 {strides = array<i32>} : memref<256x512xbf16, #tpu.memory_space<vmem>>, vector<16x512xbf16>,
    %c22_i32 = arith.constant 22 : i32
    %128 = vector.broadcast %c22_i32 : i32 to vector<8x512xi32>
    %129 = arith.shrsi %11, %128 : vector<8x512xi32>
    %c7_i32_38 = arith.constant 7 : i32
    %130 = vector.broadcast %c7_i32_38 : i32 to vector<8x512xi32>
    %131 = arith.andi %129, %130 : vector<8x512xi32>
    %c25_i32 = arith.constant 25 : i32
    %132 = vector.broadcast %c25_i32 : i32 to vector<8x512xi32>
    %133 = arith.shrsi %11, %132 : vector<8x512xi32>
    %c7_i32_39 = arith.constant 7 : i32
    %134 = vector.broadcast %c7_i32_39 : i32 to vector<8x512xi32>
    %135 = arith.andi %133, %134 : vector<8x512xi32>
    %136 = tpu.concatenate %131, %135 in 0 : vector<8x512xi32>, vector<8x512xi32> -> vector<16x512xi32>
    %137 = arith.sitofp %136 : vector<16x512xi32> to vector<16x512xf32>
    %138 = arith.truncf %137 : vector<16x512xf32> to vector<16x512xbf16>
    %c144 = arith.constant 144 : index
    %c0_40 = arith.constant 0 : index
    %139 = vector.load %arg9[%c144, %c0_40] : memref<256x512xbf16, #tpu.memory_space<vmem>>, vector<16x512xbf16>
    tpu.vector_store %arg9[%c144, %c0_40], %138 {strides = array<i32>} : memref<256x512xbf16, #tpu.memory_space<vmem>>, vector<16x512xbf16>,
    %c28_i32 = arith.constant 28 : i32
    %140 = vector.broadcast %c28_i32 : i32 to vector<8x512xi32>
    %141 = arith.shrsi %11, %140 : vector<8x512xi32>
    %c7_i32_41 = arith.constant 7 : i32
    %142 = vector.broadcast %c7_i32_41 : i32 to vector<8x512xi32>
    %143 = arith.andi %141, %142 : vector<8x512xi32>
    %c31_i32 = arith.constant 31 : i32
    %144 = vector.broadcast %c31_i32 : i32 to vector<8x512xi32>
    %145 = arith.shrsi %11, %144 : vector<8x512xi32>
    %c1_i32_42 = arith.constant 1 : i32
    %146 = vector.broadcast %c1_i32_42 : i32 to vector<8x512xi32>
    %147 = arith.andi %145, %146 : vector<8x512xi32>
    %c3_i32_43 = arith.constant 3 : i32
    %148 = vector.broadcast %c3_i32_43 : i32 to vector<8x512xi32>
    %149 = arith.andi %14, %148 : vector<8x512xi32>
    %c1_i32_44 = arith.constant 1 : i32
    %150 = vector.broadcast %c1_i32_44 : i32 to vector<8x512xi32>
    %151 = arith.shli %149, %150 : vector<8x512xi32>
    %152 = arith.ori %147, %151 : vector<8x512xi32>
    %153 = tpu.concatenate %143, %152 in 0 : vector<8x512xi32>, vector<8x512xi32> -> vector<16x512xi32>
    %154 = arith.sitofp %153 : vector<16x512xi32> to vector<16x512xf32>
    %155 = arith.truncf %154 : vector<16x512xf32> to vector<16x512xbf16>
    %c160 = arith.constant 160 : index
    %c0_45 = arith.constant 0 : index
    %156 = vector.load %arg9[%c160, %c0_45] : memref<256x512xbf16, #tpu.memory_space<vmem>>, vector<16x512xbf16>
    tpu.vector_store %arg9[%c160, %c0_45], %155 {strides = array<i32>} : memref<256x512xbf16, #tpu.memory_space<vmem>>, vector<16x512xbf16>,
    %c2_i32_46 = arith.constant 2 : i32
    %157 = vector.broadcast %c2_i32_46 : i32 to vector<8x512xi32>
    %158 = arith.shrsi %14, %157 : vector<8x512xi32>
    %c7_i32_47 = arith.constant 7 : i32
    %159 = vector.broadcast %c7_i32_47 : i32 to vector<8x512xi32>
    %160 = arith.andi %158, %159 : vector<8x512xi32>
    %c5_i32 = arith.constant 5 : i32
    %161 = vector.broadcast %c5_i32 : i32 to vector<8x512xi32>
    %162 = arith.shrsi %14, %161 : vector<8x512xi32>
    %c7_i32_48 = arith.constant 7 : i32
    %163 = vector.broadcast %c7_i32_48 : i32 to vector<8x512xi32>
    %164 = arith.andi %162, %163 : vector<8x512xi32>
    %165 = tpu.concatenate %160, %164 in 0 : vector<8x512xi32>, vector<8x512xi32> -> vector<16x512xi32>
    %166 = arith.sitofp %165 : vector<16x512xi32> to vector<16x512xf32>
    %167 = arith.truncf %166 : vector<16x512xf32> to vector<16x512xbf16>
    %c176 = arith.constant 176 : index
    %c0_49 = arith.constant 0 : index
    %168 = vector.load %arg9[%c176, %c0_49] : memref<256x512xbf16, #tpu.memory_space<vmem>>, vector<16x512xbf16>
    tpu.vector_store %arg9[%c176, %c0_49], %167 {strides = array<i32>} : memref<256x512xbf16, #tpu.memory_space<vmem>>, vector<16x512xbf16>,
    %c8_i32_50 = arith.constant 8 : i32
    %169 = vector.broadcast %c8_i32_50 : i32 to vector<8x512xi32>
    %170 = arith.shrsi %14, %169 : vector<8x512xi32>
    %c7_i32_51 = arith.constant 7 : i32
    %171 = vector.broadcast %c7_i32_51 : i32 to vector<8x512xi32>
    %172 = arith.andi %170, %171 : vector<8x512xi32>
    %c11_i32 = arith.constant 11 : i32
    %173 = vector.broadcast %c11_i32 : i32 to vector<8x512xi32>
    %174 = arith.shrsi %14, %173 : vector<8x512xi32>
    %c7_i32_52 = arith.constant 7 : i32
    %175 = vector.broadcast %c7_i32_52 : i32 to vector<8x512xi32>
    %176 = arith.andi %174, %175 : vector<8x512xi32>
    %177 = tpu.concatenate %172, %176 in 0 : vector<8x512xi32>, vector<8x512xi32> -> vector<16x512xi32>
    %178 = arith.sitofp %177 : vector<16x512xi32> to vector<16x512xf32>
    %179 = arith.truncf %178 : vector<16x512xf32> to vector<16x512xbf16>
    %c192 = arith.constant 192 : index
    %c0_53 = arith.constant 0 : index
    %180 = vector.load %arg9[%c192, %c0_53] : memref<256x512xbf16, #tpu.memory_space<vmem>>, vector<16x512xbf16>
    tpu.vector_store %arg9[%c192, %c0_53], %179 {strides = array<i32>} : memref<256x512xbf16, #tpu.memory_space<vmem>>, vector<16x512xbf16>,
    %c14_i32 = arith.constant 14 : i32
    %181 = vector.broadcast %c14_i32 : i32 to vector<8x512xi32>
    %182 = arith.shrsi %14, %181 : vector<8x512xi32>
    %c7_i32_54 = arith.constant 7 : i32
    %183 = vector.broadcast %c7_i32_54 : i32 to vector<8x512xi32>
    %184 = arith.andi %182, %183 : vector<8x512xi32>
    %c17_i32 = arith.constant 17 : i32
    %185 = vector.broadcast %c17_i32 : i32 to vector<8x512xi32>
    %186 = arith.shrsi %14, %185 : vector<8x512xi32>
    %c7_i32_55 = arith.constant 7 : i32
    %187 = vector.broadcast %c7_i32_55 : i32 to vector<8x512xi32>
    %188 = arith.andi %186, %187 : vector<8x512xi32>
    %189 = tpu.concatenate %184, %188 in 0 : vector<8x512xi32>, vector<8x512xi32> -> vector<16x512xi32>
    %190 = arith.sitofp %189 : vector<16x512xi32> to vector<16x512xf32>
    %191 = arith.truncf %190 : vector<16x512xf32> to vector<16x512xbf16>
    %c208 = arith.constant 208 : index
    %c0_56 = arith.constant 0 : index
    %192 = vector.load %arg9[%c208, %c0_56] : memref<256x512xbf16, #tpu.memory_space<vmem>>, vector<16x512xbf16>
    tpu.vector_store %arg9[%c208, %c0_56], %191 {strides = array<i32>} : memref<256x512xbf16, #tpu.memory_space<vmem>>, vector<16x512xbf16>,
    %c20_i32 = arith.constant 20 : i32
    %193 = vector.broadcast %c20_i32 : i32 to vector<8x512xi32>
    %194 = arith.shrsi %14, %193 : vector<8x512xi32>
    %c7_i32_57 = arith.constant 7 : i32
    %195 = vector.broadcast %c7_i32_57 : i32 to vector<8x512xi32>
    %196 = arith.andi %194, %195 : vector<8x512xi32>
    %c23_i32 = arith.constant 23 : i32
    %197 = vector.broadcast %c23_i32 : i32 to vector<8x512xi32>
    %198 = arith.shrsi %14, %197 : vector<8x512xi32>
    %c7_i32_58 = arith.constant 7 : i32
    %199 = vector.broadcast %c7_i32_58 : i32 to vector<8x512xi32>
    %200 = arith.andi %198, %199 : vector<8x512xi32>
    %201 = tpu.concatenate %196, %200 in 0 : vector<8x512xi32>, vector<8x512xi32> -> vector<16x512xi32>
    %202 = arith.sitofp %201 : vector<16x512xi32> to vector<16x512xf32>
    %203 = arith.truncf %202 : vector<16x512xf32> to vector<16x512xbf16>
    %c224 = arith.constant 224 : index
    %c0_59 = arith.constant 0 : index
    %204 = vector.load %arg9[%c224, %c0_59] : memref<256x512xbf16, #tpu.memory_space<vmem>>, vector<16x512xbf16>
    tpu.vector_store %arg9[%c224, %c0_59], %203 {strides = array<i32>} : memref<256x512xbf16, #tpu.memory_space<vmem>>, vector<16x512xbf16>,
    %c26_i32 = arith.constant 26 : i32
    %205 = vector.broadcast %c26_i32 : i32 to vector<8x512xi32>
    %206 = arith.shrsi %14, %205 : vector<8x512xi32>
    %c7_i32_60 = arith.constant 7 : i32
    %207 = vector.broadcast %c7_i32_60 : i32 to vector<8x512xi32>
    %208 = arith.andi %206, %207 : vector<8x512xi32>
    %c29_i32 = arith.constant 29 : i32
    %209 = vector.broadcast %c29_i32 : i32 to vector<8x512xi32>
    %210 = arith.shrsi %14, %209 : vector<8x512xi32>
    %c7_i32_61 = arith.constant 7 : i32
    %211 = vector.broadcast %c7_i32_61 : i32 to vector<8x512xi32>
    %212 = arith.andi %210, %211 : vector<8x512xi32>
    %213 = tpu.concatenate %208, %212 in 0 : vector<8x512xi32>, vector<8x512xi32> -> vector<16x512xi32>
    %214 = arith.sitofp %213 : vector<16x512xi32> to vector<16x512xf32>
    %215 = arith.truncf %214 : vector<16x512xf32> to vector<16x512xbf16>
    %c240 = arith.constant 240 : index
    %c0_62 = arith.constant 0 : index
    %216 = vector.load %arg9[%c240, %c0_62] : memref<256x512xbf16, #tpu.memory_space<vmem>>, vector<16x512xbf16>
    tpu.vector_store %arg9[%c240, %c0_62], %215 {strides = array<i32>} : memref<256x512xbf16, #tpu.memory_space<vmem>>, vector<16x512xbf16>,
    %c256_i32 = arith.constant 256 : i32
    %217 = arith.muli %c0_i32_1, %c256_i32 : i32
    %218 = tpu.assume_multiple %217, 256 : i32
    %c0_63 = arith.constant 0 : index
    %c0_64 = arith.constant 0 : index
    %219 = arith.index_cast %218 : i32 to index
    %220 = vector.load %arg3[%c0_63, %c0_64, %219] : memref<1x8x512xbf16, #tpu.memory_space<vmem>>, vector<1x8x256xbf16>
    %221 = vector.shape_cast %220 : vector<1x8x256xbf16> to vector<8x256xbf16>
    %c0_65 = arith.constant 0 : index
    %c0_66 = arith.constant 0 : index
    %222 = vector.load %arg9[%c0_65, %c0_66] : memref<256x512xbf16, #tpu.memory_space<vmem>>, vector<256x512xbf16>
    %cst_67 = arith.constant dense<0.000000e+00> : vector<8x512xf32>
    %223 = tpu.matmul %221, %222, %cst_67 {dimension_numbers = #tpu.dot_dimension_numbers<[1], [0], [0], [1], [0, 0, 1, 1], [], []>} : vector<8x256xbf16>, vector<256x512xbf16>, vector<8x512xf32> -> vector<8x512xf32>
    %224 = vector.extract_strided_slice %223 {offsets = [0, 0], sizes = [1, 512], strides = [1, 1]} : vector<8x512xf32> to vector<1x512xf32>
    %225 = vector.extract_strided_slice %223 {offsets = [1, 0], sizes = [1, 512], strides = [1, 1]} : vector<8x512xf32> to vector<1x512xf32>
    %226 = arith.addf %224, %225 : vector<1x512xf32>
    %227 = vector.extract_strided_slice %223 {offsets = [2, 0], sizes = [1, 512], strides = [1, 1]} : vector<8x512xf32> to vector<1x512xf32>
    %228 = arith.addf %226, %227 : vector<1x512xf32>
    %229 = arith.addf %3, %228 : vector<1x512xf32>
    %c1_i32_68 = arith.constant 1 : i32
    %c8_i32_69 = arith.constant 8 : i32
    %230 = arith.muli %c1_i32_68, %c8_i32_69 : i32
    %231 = tpu.assume_multiple %230, 8 : i32
    %c0_70 = arith.constant 0 : index
    %c0_71 = arith.constant 0 : index
    %232 = arith.index_cast %231 : i32 to index
    %c0_72 = arith.constant 0 : index
    %233 = vector.load %arg4[%c0_70, %c0_71, %232, %c0_72] : memref<1x3x16x512xi32, #tpu.memory_space<vmem>>, vector<1x1x8x512xi32>
    %234 = vector.shape_cast %233 : vector<1x1x8x512xi32> to vector<8x512xi32>
    %c0_73 = arith.constant 0 : index
    %c1_74 = arith.constant 1 : index
    %235 = arith.index_cast %231 : i32 to index
    %c0_75 = arith.constant 0 : index
    %236 = vector.load %arg4[%c0_73, %c1_74, %235, %c0_75] : memref<1x3x16x512xi32, #tpu.memory_space<vmem>>, vector<1x1x8x512xi32>
    %237 = vector.shape_cast %236 : vector<1x1x8x512xi32> to vector<8x512xi32>
    %c0_76 = arith.constant 0 : index
    %c2_77 = arith.constant 2 : index
    %238 = arith.index_cast %231 : i32 to index
    %c0_78 = arith.constant 0 : index
    %239 = vector.load %arg4[%c0_76, %c2_77, %238, %c0_78] : memref<1x3x16x512xi32, #tpu.memory_space<vmem>>, vector<1x1x8x512xi32>
    %240 = vector.shape_cast %239 : vector<1x1x8x512xi32> to vector<8x512xi32>
    %c0_i32_79 = arith.constant 0 : i32
    %241 = vector.broadcast %c0_i32_79 : i32 to vector<8x512xi32>
    %242 = arith.shrsi %234, %241 : vector<8x512xi32>
    %c7_i32_80 = arith.constant 7 : i32
    %243 = vector.broadcast %c7_i32_80 : i32 to vector<8x512xi32>
    %244 = arith.andi %242, %243 : vector<8x512xi32>
    %c3_i32_81 = arith.constant 3 : i32
    %245 = vector.broadcast %c3_i32_81 : i32 to vector<8x512xi32>
    %246 = arith.shrsi %234, %245 : vector<8x512xi32>
    %c7_i32_82 = arith.constant 7 : i32
    %247 = vector.broadcast %c7_i32_82 : i32 to vector<8x512xi32>
    %248 = arith.andi %246, %247 : vector<8x512xi32>
    %249 = tpu.concatenate %244, %248 in 0 : vector<8x512xi32>, vector<8x512xi32> -> vector<16x512xi32>
    %250 = arith.sitofp %249 : vector<16x512xi32> to vector<16x512xf32>
    %251 = arith.truncf %250 : vector<16x512xf32> to vector<16x512xbf16>
    %c0_83 = arith.constant 0 : index
    %c0_84 = arith.constant 0 : index
    %252 = vector.load %arg9[%c0_83, %c0_84] : memref<256x512xbf16, #tpu.memory_space<vmem>>, vector<16x512xbf16>
    tpu.vector_store %arg9[%c0_83, %c0_84], %251 {strides = array<i32>} : memref<256x512xbf16, #tpu.memory_space<vmem>>, vector<16x512xbf16>,
    %c6_i32_85 = arith.constant 6 : i32
    %253 = vector.broadcast %c6_i32_85 : i32 to vector<8x512xi32>
    %254 = arith.shrsi %234, %253 : vector<8x512xi32>
    %c7_i32_86 = arith.constant 7 : i32
    %255 = vector.broadcast %c7_i32_86 : i32 to vector<8x512xi32>
    %256 = arith.andi %254, %255 : vector<8x512xi32>
    %c9_i32_87 = arith.constant 9 : i32
    %257 = vector.broadcast %c9_i32_87 : i32 to vector<8x512xi32>
    %258 = arith.shrsi %234, %257 : vector<8x512xi32>
    %c7_i32_88 = arith.constant 7 : i32
    %259 = vector.broadcast %c7_i32_88 : i32 to vector<8x512xi32>
    %260 = arith.andi %258, %259 : vector<8x512xi32>
    %261 = tpu.concatenate %256, %260 in 0 : vector<8x512xi32>, vector<8x512xi32> -> vector<16x512xi32>
    %262 = arith.sitofp %261 : vector<16x512xi32> to vector<16x512xf32>
    %263 = arith.truncf %262 : vector<16x512xf32> to vector<16x512xbf16>
    %c16_89 = arith.constant 16 : index
    %c0_90 = arith.constant 0 : index
    %264 = vector.load %arg9[%c16_89, %c0_90] : memref<256x512xbf16, #tpu.memory_space<vmem>>, vector<16x512xbf16>
    tpu.vector_store %arg9[%c16_89, %c0_90], %263 {strides = array<i32>} : memref<256x512xbf16, #tpu.memory_space<vmem>>, vector<16x512xbf16>,
    %c12_i32_91 = arith.constant 12 : i32
    %265 = vector.broadcast %c12_i32_91 : i32 to vector<8x512xi32>
    %266 = arith.shrsi %234, %265 : vector<8x512xi32>
    %c7_i32_92 = arith.constant 7 : i32
    %267 = vector.broadcast %c7_i32_92 : i32 to vector<8x512xi32>
    %268 = arith.andi %266, %267 : vector<8x512xi32>
    %c15_i32_93 = arith.constant 15 : i32
    %269 = vector.broadcast %c15_i32_93 : i32 to vector<8x512xi32>
    %270 = arith.shrsi %234, %269 : vector<8x512xi32>
    %c7_i32_94 = arith.constant 7 : i32
    %271 = vector.broadcast %c7_i32_94 : i32 to vector<8x512xi32>
    %272 = arith.andi %270, %271 : vector<8x512xi32>
    %273 = tpu.concatenate %268, %272 in 0 : vector<8x512xi32>, vector<8x512xi32> -> vector<16x512xi32>
    %274 = arith.sitofp %273 : vector<16x512xi32> to vector<16x512xf32>
    %275 = arith.truncf %274 : vector<16x512xf32> to vector<16x512xbf16>
    %c32_95 = arith.constant 32 : index
    %c0_96 = arith.constant 0 : index
    %276 = vector.load %arg9[%c32_95, %c0_96] : memref<256x512xbf16, #tpu.memory_space<vmem>>, vector<16x512xbf16>
    tpu.vector_store %arg9[%c32_95, %c0_96], %275 {strides = array<i32>} : memref<256x512xbf16, #tpu.memory_space<vmem>>, vector<16x512xbf16>,
    %c18_i32_97 = arith.constant 18 : i32
    %277 = vector.broadcast %c18_i32_97 : i32 to vector<8x512xi32>
    %278 = arith.shrsi %234, %277 : vector<8x512xi32>
    %c7_i32_98 = arith.constant 7 : i32
    %279 = vector.broadcast %c7_i32_98 : i32 to vector<8x512xi32>
    %280 = arith.andi %278, %279 : vector<8x512xi32>
    %c21_i32_99 = arith.constant 21 : i32
    %281 = vector.broadcast %c21_i32_99 : i32 to vector<8x512xi32>
    %282 = arith.shrsi %234, %281 : vector<8x512xi32>
    %c7_i32_100 = arith.constant 7 : i32
    %283 = vector.broadcast %c7_i32_100 : i32 to vector<8x512xi32>
    %284 = arith.andi %282, %283 : vector<8x512xi32>
    %285 = tpu.concatenate %280, %284 in 0 : vector<8x512xi32>, vector<8x512xi32> -> vector<16x512xi32>
    %286 = arith.sitofp %285 : vector<16x512xi32> to vector<16x512xf32>
    %287 = arith.truncf %286 : vector<16x512xf32> to vector<16x512xbf16>
    %c48_101 = arith.constant 48 : index
    %c0_102 = arith.constant 0 : index
    %288 = vector.load %arg9[%c48_101, %c0_102] : memref<256x512xbf16, #tpu.memory_space<vmem>>, vector<16x512xbf16>
    tpu.vector_store %arg9[%c48_101, %c0_102], %287 {strides = array<i32>} : memref<256x512xbf16, #tpu.memory_space<vmem>>, vector<16x512xbf16>,
    %c24_i32_103 = arith.constant 24 : i32
    %289 = vector.broadcast %c24_i32_103 : i32 to vector<8x512xi32>
    %290 = arith.shrsi %234, %289 : vector<8x512xi32>
    %c7_i32_104 = arith.constant 7 : i32
    %291 = vector.broadcast %c7_i32_104 : i32 to vector<8x512xi32>
    %292 = arith.andi %290, %291 : vector<8x512xi32>
    %c27_i32_105 = arith.constant 27 : i32
    %293 = vector.broadcast %c27_i32_105 : i32 to vector<8x512xi32>
    %294 = arith.shrsi %234, %293 : vector<8x512xi32>
    %c7_i32_106 = arith.constant 7 : i32
    %295 = vector.broadcast %c7_i32_106 : i32 to vector<8x512xi32>
    %296 = arith.andi %294, %295 : vector<8x512xi32>
    %297 = tpu.concatenate %292, %296 in 0 : vector<8x512xi32>, vector<8x512xi32> -> vector<16x512xi32>
    %298 = arith.sitofp %297 : vector<16x512xi32> to vector<16x512xf32>
    %299 = arith.truncf %298 : vector<16x512xf32> to vector<16x512xbf16>
    %c64_107 = arith.constant 64 : index
    %c0_108 = arith.constant 0 : index
    %300 = vector.load %arg9[%c64_107, %c0_108] : memref<256x512xbf16, #tpu.memory_space<vmem>>, vector<16x512xbf16>
    tpu.vector_store %arg9[%c64_107, %c0_108], %299 {strides = array<i32>} : memref<256x512xbf16, #tpu.memory_space<vmem>>, vector<16x512xbf16>,
    %c30_i32_109 = arith.constant 30 : i32
    %301 = vector.broadcast %c30_i32_109 : i32 to vector<8x512xi32>
    %302 = arith.shrsi %234, %301 : vector<8x512xi32>
    %c3_i32_110 = arith.constant 3 : i32
    %303 = vector.broadcast %c3_i32_110 : i32 to vector<8x512xi32>
    %304 = arith.andi %302, %303 : vector<8x512xi32>
    %c1_i32_111 = arith.constant 1 : i32
    %305 = vector.broadcast %c1_i32_111 : i32 to vector<8x512xi32>
    %306 = arith.andi %237, %305 : vector<8x512xi32>
    %c2_i32_112 = arith.constant 2 : i32
    %307 = vector.broadcast %c2_i32_112 : i32 to vector<8x512xi32>
    %308 = arith.shli %306, %307 : vector<8x512xi32>
    %309 = arith.ori %304, %308 : vector<8x512xi32>
    %c1_i32_113 = arith.constant 1 : i32
    %310 = vector.broadcast %c1_i32_113 : i32 to vector<8x512xi32>
    %311 = arith.shrsi %237, %310 : vector<8x512xi32>
    %c7_i32_114 = arith.constant 7 : i32
    %312 = vector.broadcast %c7_i32_114 : i32 to vector<8x512xi32>
    %313 = arith.andi %311, %312 : vector<8x512xi32>
    %314 = tpu.concatenate %309, %313 in 0 : vector<8x512xi32>, vector<8x512xi32> -> vector<16x512xi32>
    %315 = arith.sitofp %314 : vector<16x512xi32> to vector<16x512xf32>
    %316 = arith.truncf %315 : vector<16x512xf32> to vector<16x512xbf16>
    %c80_115 = arith.constant 80 : index
    %c0_116 = arith.constant 0 : index
    %317 = vector.load %arg9[%c80_115, %c0_116] : memref<256x512xbf16, #tpu.memory_space<vmem>>, vector<16x512xbf16>
    tpu.vector_store %arg9[%c80_115, %c0_116], %316 {strides = array<i32>} : memref<256x512xbf16, #tpu.memory_space<vmem>>, vector<16x512xbf16>,
    %c4_i32_117 = arith.constant 4 : i32
    %318 = vector.broadcast %c4_i32_117 : i32 to vector<8x512xi32>
    %319 = arith.shrsi %237, %318 : vector<8x512xi32>
    %c7_i32_118 = arith.constant 7 : i32
    %320 = vector.broadcast %c7_i32_118 : i32 to vector<8x512xi32>
    %321 = arith.andi %319, %320 : vector<8x512xi32>
    %c7_i32_119 = arith.constant 7 : i32
    %322 = vector.broadcast %c7_i32_119 : i32 to vector<8x512xi32>
    %323 = arith.shrsi %237, %322 : vector<8x512xi32>
    %c7_i32_120 = arith.constant 7 : i32
    %324 = vector.broadcast %c7_i32_120 : i32 to vector<8x512xi32>
    %325 = arith.andi %323, %324 : vector<8x512xi32>
    %326 = tpu.concatenate %321, %325 in 0 : vector<8x512xi32>, vector<8x512xi32> -> vector<16x512xi32>
    %327 = arith.sitofp %326 : vector<16x512xi32> to vector<16x512xf32>
    %328 = arith.truncf %327 : vector<16x512xf32> to vector<16x512xbf16>
    %c96_121 = arith.constant 96 : index
    %c0_122 = arith.constant 0 : index
    %329 = vector.load %arg9[%c96_121, %c0_122] : memref<256x512xbf16, #tpu.memory_space<vmem>>, vector<16x512xbf16>
    tpu.vector_store %arg9[%c96_121, %c0_122], %328 {strides = array<i32>} : memref<256x512xbf16, #tpu.memory_space<vmem>>, vector<16x512xbf16>,
    %c10_i32_123 = arith.constant 10 : i32
    %330 = vector.broadcast %c10_i32_123 : i32 to vector<8x512xi32>
    %331 = arith.shrsi %237, %330 : vector<8x512xi32>
    %c7_i32_124 = arith.constant 7 : i32
    %332 = vector.broadcast %c7_i32_124 : i32 to vector<8x512xi32>
    %333 = arith.andi %331, %332 : vector<8x512xi32>
    %c13_i32_125 = arith.constant 13 : i32
    %334 = vector.broadcast %c13_i32_125 : i32 to vector<8x512xi32>
    %335 = arith.shrsi %237, %334 : vector<8x512xi32>
    %c7_i32_126 = arith.constant 7 : i32
    %336 = vector.broadcast %c7_i32_126 : i32 to vector<8x512xi32>
    %337 = arith.andi %335, %336 : vector<8x512xi32>
    %338 = tpu.concatenate %333, %337 in 0 : vector<8x512xi32>, vector<8x512xi32> -> vector<16x512xi32>
    %339 = arith.sitofp %338 : vector<16x512xi32> to vector<16x512xf32>
    %340 = arith.truncf %339 : vector<16x512xf32> to vector<16x512xbf16>
    %c112_127 = arith.constant 112 : index
    %c0_128 = arith.constant 0 : index
    %341 = vector.load %arg9[%c112_127, %c0_128] : memref<256x512xbf16, #tpu.memory_space<vmem>>, vector<16x512xbf16>
    tpu.vector_store %arg9[%c112_127, %c0_128], %340 {strides = array<i32>} : memref<256x512xbf16, #tpu.memory_space<vmem>>, vector<16x512xbf16>,
    %c16_i32_129 = arith.constant 16 : i32
    %342 = vector.broadcast %c16_i32_129 : i32 to vector<8x512xi32>
    %343 = arith.shrsi %237, %342 : vector<8x512xi32>
    %c7_i32_130 = arith.constant 7 : i32
    %344 = vector.broadcast %c7_i32_130 : i32 to vector<8x512xi32>
    %345 = arith.andi %343, %344 : vector<8x512xi32>
    %c19_i32_131 = arith.constant 19 : i32
    %346 = vector.broadcast %c19_i32_131 : i32 to vector<8x512xi32>
    %347 = arith.shrsi %237, %346 : vector<8x512xi32>
    %c7_i32_132 = arith.constant 7 : i32
    %348 = vector.broadcast %c7_i32_132 : i32 to vector<8x512xi32>
    %349 = arith.andi %347, %348 : vector<8x512xi32>
    %350 = tpu.concatenate %345, %349 in 0 : vector<8x512xi32>, vector<8x512xi32> -> vector<16x512xi32>
    %351 = arith.sitofp %350 : vector<16x512xi32> to vector<16x512xf32>
    %352 = arith.truncf %351 : vector<16x512xf32> to vector<16x512xbf16>
    %c128_133 = arith.constant 128 : index
    %c0_134 = arith.constant 0 : index
    %353 = vector.load %arg9[%c128_133, %c0_134] : memref<256x512xbf16, #tpu.memory_space<vmem>>, vector<16x512xbf16>
    tpu.vector_store %arg9[%c128_133, %c0_134], %352 {strides = array<i32>} : memref<256x512xbf16, #tpu.memory_space<vmem>>, vector<16x512xbf16>,
    %c22_i32_135 = arith.constant 22 : i32
    %354 = vector.broadcast %c22_i32_135 : i32 to vector<8x512xi32>
    %355 = arith.shrsi %237, %354 : vector<8x512xi32>
    %c7_i32_136 = arith.constant 7 : i32
    %356 = vector.broadcast %c7_i32_136 : i32 to vector<8x512xi32>
    %357 = arith.andi %355, %356 : vector<8x512xi32>
    %c25_i32_137 = arith.constant 25 : i32
    %358 = vector.broadcast %c25_i32_137 : i32 to vector<8x512xi32>
    %359 = arith.shrsi %237, %358 : vector<8x512xi32>
    %c7_i32_138 = arith.constant 7 : i32
    %360 = vector.broadcast %c7_i32_138 : i32 to vector<8x512xi32>
    %361 = arith.andi %359, %360 : vector<8x512xi32>
    %362 = tpu.concatenate %357, %361 in 0 : vector<8x512xi32>, vector<8x512xi32> -> vector<16x512xi32>
    %363 = arith.sitofp %362 : vector<16x512xi32> to vector<16x512xf32>
    %364 = arith.truncf %363 : vector<16x512xf32> to vector<16x512xbf16>
    %c144_139 = arith.constant 144 : index
    %c0_140 = arith.constant 0 : index
    %365 = vector.load %arg9[%c144_139, %c0_140] : memref<256x512xbf16, #tpu.memory_space<vmem>>, vector<16x512xbf16>
    tpu.vector_store %arg9[%c144_139, %c0_140], %364 {strides = array<i32>} : memref<256x512xbf16, #tpu.memory_space<vmem>>, vector<16x512xbf16>,
    %c28_i32_141 = arith.constant 28 : i32
    %366 = vector.broadcast %c28_i32_141 : i32 to vector<8x512xi32>
    %367 = arith.shrsi %237, %366 : vector<8x512xi32>
    %c7_i32_142 = arith.constant 7 : i32
    %368 = vector.broadcast %c7_i32_142 : i32 to vector<8x512xi32>
    %369 = arith.andi %367, %368 : vector<8x512xi32>
    %c31_i32_143 = arith.constant 31 : i32
    %370 = vector.broadcast %c31_i32_143 : i32 to vector<8x512xi32>
    %371 = arith.shrsi %237, %370 : vector<8x512xi32>
    %c1_i32_144 = arith.constant 1 : i32
    %372 = vector.broadcast %c1_i32_144 : i32 to vector<8x512xi32>
    %373 = arith.andi %371, %372 : vector<8x512xi32>
    %c3_i32_145 = arith.constant 3 : i32
    %374 = vector.broadcast %c3_i32_145 : i32 to vector<8x512xi32>
    %375 = arith.andi %240, %374 : vector<8x512xi32>
    %c1_i32_146 = arith.constant 1 : i32
    %376 = vector.broadcast %c1_i32_146 : i32 to vector<8x512xi32>
    %377 = arith.shli %375, %376 : vector<8x512xi32>
    %378 = arith.ori %373, %377 : vector<8x512xi32>
    %379 = tpu.concatenate %369, %378 in 0 : vector<8x512xi32>, vector<8x512xi32> -> vector<16x512xi32>
    %380 = arith.sitofp %379 : vector<16x512xi32> to vector<16x512xf32>
    %381 = arith.truncf %380 : vector<16x512xf32> to vector<16x512xbf16>
    %c160_147 = arith.constant 160 : index
    %c0_148 = arith.constant 0 : index
    %382 = vector.load %arg9[%c160_147, %c0_148] : memref<256x512xbf16, #tpu.memory_space<vmem>>, vector<16x512xbf16>
    tpu.vector_store %arg9[%c160_147, %c0_148], %381 {strides = array<i32>} : memref<256x512xbf16, #tpu.memory_space<vmem>>, vector<16x512xbf16>,
    %c2_i32_149 = arith.constant 2 : i32
    %383 = vector.broadcast %c2_i32_149 : i32 to vector<8x512xi32>
    %384 = arith.shrsi %240, %383 : vector<8x512xi32>
    %c7_i32_150 = arith.constant 7 : i32
    %385 = vector.broadcast %c7_i32_150 : i32 to vector<8x512xi32>
    %386 = arith.andi %384, %385 : vector<8x512xi32>
    %c5_i32_151 = arith.constant 5 : i32
    %387 = vector.broadcast %c5_i32_151 : i32 to vector<8x512xi32>
    %388 = arith.shrsi %240, %387 : vector<8x512xi32>
    %c7_i32_152 = arith.constant 7 : i32
    %389 = vector.broadcast %c7_i32_152 : i32 to vector<8x512xi32>
    %390 = arith.andi %388, %389 : vector<8x512xi32>
    %391 = tpu.concatenate %386, %390 in 0 : vector<8x512xi32>, vector<8x512xi32> -> vector<16x512xi32>
    %392 = arith.sitofp %391 : vector<16x512xi32> to vector<16x512xf32>
    %393 = arith.truncf %392 : vector<16x512xf32> to vector<16x512xbf16>
    %c176_153 = arith.constant 176 : index
    %c0_154 = arith.constant 0 : index
    %394 = vector.load %arg9[%c176_153, %c0_154] : memref<256x512xbf16, #tpu.memory_space<vmem>>, vector<16x512xbf16>
    tpu.vector_store %arg9[%c176_153, %c0_154], %393 {strides = array<i32>} : memref<256x512xbf16, #tpu.memory_space<vmem>>, vector<16x512xbf16>,
    %c8_i32_155 = arith.constant 8 : i32
    %395 = vector.broadcast %c8_i32_155 : i32 to vector<8x512xi32>
    %396 = arith.shrsi %240, %395 : vector<8x512xi32>
    %c7_i32_156 = arith.constant 7 : i32
    %397 = vector.broadcast %c7_i32_156 : i32 to vector<8x512xi32>
    %398 = arith.andi %396, %397 : vector<8x512xi32>
    %c11_i32_157 = arith.constant 11 : i32
    %399 = vector.broadcast %c11_i32_157 : i32 to vector<8x512xi32>
    %400 = arith.shrsi %240, %399 : vector<8x512xi32>
    %c7_i32_158 = arith.constant 7 : i32
    %401 = vector.broadcast %c7_i32_158 : i32 to vector<8x512xi32>
    %402 = arith.andi %400, %401 : vector<8x512xi32>
    %403 = tpu.concatenate %398, %402 in 0 : vector<8x512xi32>, vector<8x512xi32> -> vector<16x512xi32>
    %404 = arith.sitofp %403 : vector<16x512xi32> to vector<16x512xf32>
    %405 = arith.truncf %404 : vector<16x512xf32> to vector<16x512xbf16>
    %c192_159 = arith.constant 192 : index
    %c0_160 = arith.constant 0 : index
    %406 = vector.load %arg9[%c192_159, %c0_160] : memref<256x512xbf16, #tpu.memory_space<vmem>>, vector<16x512xbf16>
    tpu.vector_store %arg9[%c192_159, %c0_160], %405 {strides = array<i32>} : memref<256x512xbf16, #tpu.memory_space<vmem>>, vector<16x512xbf16>,
    %c14_i32_161 = arith.constant 14 : i32
    %407 = vector.broadcast %c14_i32_161 : i32 to vector<8x512xi32>
    %408 = arith.shrsi %240, %407 : vector<8x512xi32>
    %c7_i32_162 = arith.constant 7 : i32
    %409 = vector.broadcast %c7_i32_162 : i32 to vector<8x512xi32>
    %410 = arith.andi %408, %409 : vector<8x512xi32>
    %c17_i32_163 = arith.constant 17 : i32
    %411 = vector.broadcast %c17_i32_163 : i32 to vector<8x512xi32>
    %412 = arith.shrsi %240, %411 : vector<8x512xi32>
    %c7_i32_164 = arith.constant 7 : i32
    %413 = vector.broadcast %c7_i32_164 : i32 to vector<8x512xi32>
    %414 = arith.andi %412, %413 : vector<8x512xi32>
    %415 = tpu.concatenate %410, %414 in 0 : vector<8x512xi32>, vector<8x512xi32> -> vector<16x512xi32>
    %416 = arith.sitofp %415 : vector<16x512xi32> to vector<16x512xf32>
    %417 = arith.truncf %416 : vector<16x512xf32> to vector<16x512xbf16>
    %c208_165 = arith.constant 208 : index
    %c0_166 = arith.constant 0 : index
    %418 = vector.load %arg9[%c208_165, %c0_166] : memref<256x512xbf16, #tpu.memory_space<vmem>>, vector<16x512xbf16>
    tpu.vector_store %arg9[%c208_165, %c0_166], %417 {strides = array<i32>} : memref<256x512xbf16, #tpu.memory_space<vmem>>, vector<16x512xbf16>,
    %c20_i32_167 = arith.constant 20 : i32
    %419 = vector.broadcast %c20_i32_167 : i32 to vector<8x512xi32>
    %420 = arith.shrsi %240, %419 : vector<8x512xi32>
    %c7_i32_168 = arith.constant 7 : i32
    %421 = vector.broadcast %c7_i32_168 : i32 to vector<8x512xi32>
    %422 = arith.andi %420, %421 : vector<8x512xi32>
    %c23_i32_169 = arith.constant 23 : i32
    %423 = vector.broadcast %c23_i32_169 : i32 to vector<8x512xi32>
    %424 = arith.shrsi %240, %423 : vector<8x512xi32>
    %c7_i32_170 = arith.constant 7 : i32
    %425 = vector.broadcast %c7_i32_170 : i32 to vector<8x512xi32>
    %426 = arith.andi %424, %425 : vector<8x512xi32>
    %427 = tpu.concatenate %422, %426 in 0 : vector<8x512xi32>, vector<8x512xi32> -> vector<16x512xi32>
    %428 = arith.sitofp %427 : vector<16x512xi32> to vector<16x512xf32>
    %429 = arith.truncf %428 : vector<16x512xf32> to vector<16x512xbf16>
    %c224_171 = arith.constant 224 : index
    %c0_172 = arith.constant 0 : index
    %430 = vector.load %arg9[%c224_171, %c0_172] : memref<256x512xbf16, #tpu.memory_space<vmem>>, vector<16x512xbf16>
    tpu.vector_store %arg9[%c224_171, %c0_172], %429 {strides = array<i32>} : memref<256x512xbf16, #tpu.memory_space<vmem>>, vector<16x512xbf16>,
    %c26_i32_173 = arith.constant 26 : i32
    %431 = vector.broadcast %c26_i32_173 : i32 to vector<8x512xi32>
    %432 = arith.shrsi %240, %431 : vector<8x512xi32>
    %c7_i32_174 = arith.constant 7 : i32
    %433 = vector.broadcast %c7_i32_174 : i32 to vector<8x512xi32>
    %434 = arith.andi %432, %433 : vector<8x512xi32>
    %c29_i32_175 = arith.constant 29 : i32
    %435 = vector.broadcast %c29_i32_175 : i32 to vector<8x512xi32>
    %436 = arith.shrsi %240, %435 : vector<8x512xi32>
    %c7_i32_176 = arith.constant 7 : i32
    %437 = vector.broadcast %c7_i32_176 : i32 to vector<8x512xi32>
    %438 = arith.andi %436, %437 : vector<8x512xi32>
    %439 = tpu.concatenate %434, %438 in 0 : vector<8x512xi32>, vector<8x512xi32> -> vector<16x512xi32>
    %440 = arith.sitofp %439 : vector<16x512xi32> to vector<16x512xf32>
    %441 = arith.truncf %440 : vector<16x512xf32> to vector<16x512xbf16>
    %c240_177 = arith.constant 240 : index
    %c0_178 = arith.constant 0 : index
    %442 = vector.load %arg9[%c240_177, %c0_178] : memref<256x512xbf16, #tpu.memory_space<vmem>>, vector<16x512xbf16>
    tpu.vector_store %arg9[%c240_177, %c0_178], %441 {strides = array<i32>} : memref<256x512xbf16, #tpu.memory_space<vmem>>, vector<16x512xbf16>,
    %c256_i32_179 = arith.constant 256 : i32
    %443 = arith.muli %c1_i32_68, %c256_i32_179 : i32
    %444 = tpu.assume_multiple %443, 256 : i32
    %c0_180 = arith.constant 0 : index
    %c0_181 = arith.constant 0 : index
    %445 = arith.index_cast %444 : i32 to index
    %446 = vector.load %arg3[%c0_180, %c0_181, %445] : memref<1x8x512xbf16, #tpu.memory_space<vmem>>, vector<1x8x256xbf16>
    %447 = vector.shape_cast %446 : vector<1x8x256xbf16> to vector<8x256xbf16>
    %c0_182 = arith.constant 0 : index
    %c0_183 = arith.constant 0 : index
    %448 = vector.load %arg9[%c0_182, %c0_183] : memref<256x512xbf16, #tpu.memory_space<vmem>>, vector<256x512xbf16>
    %cst_184 = arith.constant dense<0.000000e+00> : vector<8x512xf32>
    %449 = tpu.matmul %447, %448, %cst_184 {dimension_numbers = #tpu.dot_dimension_numbers<[1], [0], [0], [1], [0, 0, 1, 1], [], []>} : vector<8x256xbf16>, vector<256x512xbf16>, vector<8x512xf32> -> vector<8x512xf32>
    %450 = vector.extract_strided_slice %449 {offsets = [0, 0], sizes = [1, 512], strides = [1, 1]} : vector<8x512xf32> to vector<1x512xf32>
    %451 = vector.extract_strided_slice %449 {offsets = [1, 0], sizes = [1, 512], strides = [1, 1]} : vector<8x512xf32> to vector<1x512xf32>
    %452 = arith.addf %450, %451 : vector<1x512xf32>
    %453 = vector.extract_strided_slice %449 {offsets = [2, 0], sizes = [1, 512], strides = [1, 1]} : vector<8x512xf32> to vector<1x512xf32>
    %454 = arith.addf %452, %453 : vector<1x512xf32>
    %455 = arith.addf %229, %454 : vector<1x512xf32>
    %c2_i32_185 = arith.constant 2 : i32
    %c0_186 = arith.constant 0 : index
    %c0_187 = arith.constant 0 : index
    %456 = vector.load %arg8[%c0_186, %c0_187] : memref<1x512xf32, #tpu.memory_space<vmem>>, vector<1x512xf32>
    %457 = arith.addf %456, %455 : vector<1x512xf32>
    %c0_188 = arith.constant 0 : index
    %c0_189 = arith.constant 0 : index
    %458 = vector.load %arg8[%c0_188, %c0_189] : memref<1x512xf32, #tpu.memory_space<vmem>>, vector<1x512xf32>
    tpu.vector_store %arg8[%c0_188, %c0_189], %457 {strides = array<i32>} : memref<1x512xf32, #tpu.memory_space<vmem>>, vector<1x512xf32>,
    %c0_i32_190 = arith.constant 0 : i32
    %459 = arith.cmpi eq, %arg1, %c0_i32_190 : i32
    %460 = arith.extui %459 : i1 to i32
    %c0_i32_191 = arith.constant 0 : i32
    %461 = arith.cmpi ne, %460, %c0_i32_191 : i32
    scf.if %461 {
      %c0_192 = arith.constant 0 : index
      %c0_193 = arith.constant 0 : index
      %462 = vector.load %arg7[%c0_192, %c0_193] : memref<1x512xf32, #tpu.memory_space<vmem>>, vector<1x512xf32>
      %c0_194 = arith.constant 0 : index
      %c0_195 = arith.constant 0 : index
      %463 = vector.load %arg5[%c0_194, %c0_195] : memref<1x512xf32, #tpu.memory_space<vmem>>, vector<1x512xf32>
      %c0_196 = arith.constant 0 : index
      %c0_197 = arith.constant 0 : index
      %464 = vector.load %arg8[%c0_196, %c0_197] : memref<1x512xf32, #tpu.memory_space<vmem>>, vector<1x512xf32>
      %465 = arith.mulf %463, %464 : vector<1x512xf32>
      %466 = arith.addf %462, %465 : vector<1x512xf32>
      %c0_198 = arith.constant 0 : index
      %467 = memref.load %arg2[%c0_198] : memref<1xf32, #tpu.memory_space<smem>>
      %c0_199 = arith.constant 0 : index
      %c0_200 = arith.constant 0 : index
      %468 = vector.load %arg6[%c0_199, %c0_200] : memref<1x512xf32, #tpu.memory_space<vmem>>, vector<1x512xf32>
      %469 = vector.broadcast %467 : f32 to vector<1x512xf32>
      %470 = arith.mulf %469, %468 : vector<1x512xf32>
      %471 = arith.subf %466, %470 : vector<1x512xf32>
      %c0_201 = arith.constant 0 : index
      %c0_202 = arith.constant 0 : index
      %472 = vector.load %arg8[%c0_201, %c0_202] : memref<1x512xf32, #tpu.memory_space<vmem>>, vector<1x512xf32>
      tpu.vector_store %arg8[%c0_201, %c0_202], %471 {strides = array<i32>} : memref<1x512xf32, #tpu.memory_space<vmem>>, vector<1x512xf32>,
    } else {
    }
    return
  }
  func.func @transform_0(%arg0: i32, %arg1: i32) -> i32 {
    %c0_i32 = arith.constant 0 : i32
    %c0_i32_0 = arith.constant 0 : i32
    return %c0_i32 : i32
  }
  func.func @transform_1(%arg0: i32, %arg1: i32) -> (i32, i32, i32) {
    %c0_i32 = arith.constant 0 : i32
    %c0_i32_0 = arith.constant 0 : i32
    %c0_i32_1 = arith.constant 0 : i32
    return %arg1, %c0_i32, %c0_i32_0 : i32, i32, i32
  }
  func.func @transform_2(%arg0: i32, %arg1: i32) -> (i32, i32, i32, i32) {
    %c0_i32 = arith.constant 0 : i32
    %c0_i32_0 = arith.constant 0 : i32
    %c0_i32_1 = arith.constant 0 : i32
    return %arg1, %c0_i32, %c0_i32_0, %arg0 : i32, i32, i32, i32
  }
  func.func @transform_3(%arg0: i32, %arg1: i32) -> (i32, i32) {
    %c0_i32 = arith.constant 0 : i32
    %c0_i32_0 = arith.constant 0 : i32
    return %c0_i32, %arg0 : i32, i32
  }
  func.func @transform_4(%arg0: i32, %arg1: i32) -> (i32, i32) {
    %c0_i32 = arith.constant 0 : i32
    %c0_i32_0 = arith.constant 0 : i32
    return %c0_i32, %arg0 : i32, i32
  }
  func.func @transform_5(%arg0: i32, %arg1: i32) -> (i32, i32) {
    %c0_i32 = arith.constant 0 : i32
    %c0_i32_0 = arith.constant 0 : i32
    return %c0_i32, %arg0 : i32, i32
  }
  func.func @transform_6(%arg0: i32, %arg1: i32) -> (i32, i32) {
    %c0_i32 = arith.constant 0 : i32
    %c0_i32_0 = arith.constant 0 : i32
    return %c0_i32, %arg0 : i32, i32
  }
}

</mosaic_0001>

<llo_original>
// kernel: tpu_custom_call.1
$region0: #{tpu_custom_call.1}
  #allocation0 [shape = 'u32[]', space=smem, size = 0x4, offset = 0x4, fixed_abs, tag = 'smem constant byte address 0x4 - core index']
  #allocation1 [shape = 'u32[144,128]{1,0:T(1,128)}', space=vmem, size = 0x12000, scoped, tag = 'internal scratch']
  #allocation2 [shape = 'bf16[256,512]{1,0:T(16,128)(2,1)}', space=vmem, size = 0x40000, scoped, tag = 'scratch operand']
  #allocation3 [shape = 'f32[1]{0:T(128)S(6)}', space=smem, size = 0x200, scoped, tag = 'scoped memory for tpu_custom_call.1']
  %s0 = inlined_call_operand.<no memory space> [shape: f32[1], index: 0, kind: input, shape index: {}]
  %s1 = inlined_call_operand.hbm [shape: bf16[1,8,512], index: 1, kind: input, shape index: {}]
  %s2 = inlined_call_operand.hbm [shape: s32[1,3,16,2048], index: 2, kind: input, shape index: {}]
  %s3 = inlined_call_operand.hbm [shape: f32[1,2048], index: 3, kind: input, shape index: {}]
  %s4 = inlined_call_operand.hbm [shape: f32[1,2048], index: 4, kind: input, shape index: {}]
  %s5 = inlined_call_operand.vmem [shape: f32[1,2048], index: 5, kind: input, shape index: {}]
  %s6 = inlined_call_operand.hbm [shape: f32[1,2048], index: 6, kind: output, shape index: {}]
  %s7 = sld [smem:[#allocation0]]
  $region81: #{tpu_custom_call.1} parent=0
    _
  %s9 = ssub.s32 1, %s7
  %s10 = scalar_select 0, %s9, %s7
  %11 = sst [smem:[#allocation3]] %s0
  $region1: #{tpu_custom_call.1} parent=0
    #allocation4 [shape = 'u8[8192]{0}', space=vmem, size = 0x2000, scoped, tag = 'input window, operand 1, single buffered']
    #allocation5 [shape = 's32[2]{0}', space=sflag, size = 0x8, scoped, tag = 'scoped memory for tpu_custom_call.1']
    #allocation6 [shape = 's32[2]{0}', space=sflag, size = 0x8, scoped, tag = 'scoped memory for tpu_custom_call.1']
    #allocation7 [shape = 'u8[196608]{0}', space=vmem, size = 0x30000, scoped, tag = 'input window, operand 2']
    #allocation8 [shape = 's32[2]{0}', space=sflag, size = 0x8, scoped, tag = 'scoped memory for tpu_custom_call.1']
    #allocation9 [shape = 'u8[4096]{0}', space=vmem, size = 0x1000, scoped, tag = 'input window, operand 3']
    #allocation10 [shape = 'u8[4096]{0}', space=vmem, size = 0x1000, scoped, tag = 'input window, operand 4']
    #allocation11 [shape = 's32[2]{0}', space=sflag, size = 0x8, scoped, tag = 'scoped memory for tpu_custom_call.1']
    #allocation12 [shape = 'u8[4096]{0}', space=vmem, size = 0x1000, scoped, tag = 'output window, operand 0']
    %12 = vsyncpa [#allocation5], 0
    %13 = vsyncpa [#allocation8], 0
    %s14 = scalar_lea.sflag [#allocation8], 1
    %15 = vsyncpa %s14, 0
    %16 = vsyncpa [#allocation11], 0
    %s17 = scalar_lea.sflag [#allocation11], 1
    %18 = vsyncpa %s17, 0
    %19 = vsyncpa [#allocation6], 0
    %s20 = scalar_lea.sflag [#allocation6], 1
    %21 = vsyncpa %s20, 0
    loop: start=0, step=1, limit=6
    $region2: #{tpu_custom_call.1} parent=1 // loop_pre_header
      _
    $region3: #{tpu_custom_call.1} parent=1 // loop_header
      %s23 = sphi 0, %s27
      %p24 = scmp.ge.s32.totalorder %s23, 6
      %s30 = sphi 0, %s42
      %s31 = sphi 0, %s38
      %s32 = sphi 0, %s30
      %s33 = sphi 0, %s31
      %s34 = sphi 0, %s32
      %s35 = sphi 0, %s33
      %s43 = sphi 0, %s43
      %s45 = sphi 0, %s43
      %s46 = sphi 0, %s45
      %s60 = sphi 0, %s46
      %s66 = sphi 0, %s68
      %s69 = sphi 0, %s66
      %s70 = sphi 0, %s69
      %s86 = sphi 0, %s70
      %s94 = sphi 0, %s96
      %s97 = sphi 0, %s94
      %s98 = sphi 0, %s97
      %s114 = sphi 0, %s98
      %s120 = sphi 0, %s122
      %s123 = sphi 0, %s120
      %s124 = sphi 0, %s123
      %s140 = sphi 0, %s124
      %s146 = sphi 0, %s148
      %s149 = sphi 0, %s146
      %s150 = sphi 0, %s149
      %s166 = sphi 0, %s150
      %s172 = sphi 0, %s174
      %s175 = sphi 0, %s172
      %s176 = sphi 0, %s175
      %s192 = sphi 0, %s176
      %s198 = sphi 0, %s200
      %s201 = sphi 0, %s198
      %s202 = sphi 0, %s201
      %s218 = sphi 0, %s202
    $region4: #{tpu_custom_call.1} parent=1 // loop_header_branch
      %26 = sbr.rel (%p24) target = $region8
    $region5: #{tpu_custom_call.1} parent=1 // loop_body
      %s28 = ssub.s32 %s23, 1
      %s29 = ssub.s32 %s23, 2
      %s36 = sadd.s32 1, %s31
      %p37 = scmp.ge.s32.totalorder %s36, 1
      %s38 = scalar_select %p37, 0, %s36
      %s39 = sadd.s32 1, %s30
      %s40 = scalar_select %p37, %s39, %s30
      %p41 = scmp.ge.s32.totalorder %s40, 4
      %s42 = scalar_select %p41, 0, %s40
      %s44 = sadd.s32 %s43, 1
      %p47 = scmp.eq.s32.totalorder %s23, 3
      %p48 = scmp.ne.s32.totalorder %s43, %s45
      %p49 = scmp.eq.s32.totalorder %s23, 0
      %p50 = por %p48, %p49
      %p51 = scmp.ne.s32.totalorder %s43, %s45
      %p52 = scmp.eq.s32.totalorder %s28, 3
      %p53 = por %p51, %p52
      %p54 = scmp.ne.s32.totalorder %s45, %s46
      %p55 = scmp.eq.s32.totalorder %s28, 0
      %p56 = por %p54, %p55
      %p57 = scmp.ne.s32.totalorder %s45, %s46
      %p58 = scmp.eq.s32.totalorder %s29, 3
      %p59 = por %p57, %p58
      %p61 = scmp.ne.s32.totalorder %s46, %s60
      %p62 = scmp.eq.s32.totalorder %s29, 0
      %p63 = por %p61, %p62
      %s64 = ssub.s32 %s31, %s38
      %p65 = scmp.eq.s32.totalorder %s64, 0
      %s67 = sadd.s32 %s66, 1
      %s68 = scalar_select %p65, %s66, %s67
      %p71 = pneg %p65
      %p72 = scmp.eq.s32.totalorder %s23, 3
      %p73 = por %p71, %p72
      %p74 = scmp.ne.s32.totalorder %s66, %s69
      %p75 = scmp.eq.s32.totalorder %s23, 0
      %p76 = por %p74, %p75
      %p77 = scmp.ne.s32.totalorder %s66, %s69
      %p78 = scmp.eq.s32.totalorder %s28, 3
      %p79 = por %p77, %p78
      %p80 = scmp.ne.s32.totalorder %s69, %s70
      %p81 = scmp.eq.s32.totalorder %s28, 0
      %p82 = por %p80, %p81
      %p83 = scmp.ne.s32.totalorder %s69, %s70
      %p84 = scmp.eq.s32.totalorder %s29, 3
      %p85 = por %p83, %p84
      %p87 = scmp.ne.s32.totalorder %s70, %s86
      %p88 = scmp.eq.s32.totalorder %s29, 0
      %p89 = por %p87, %p88
      %s90 = ssub.s32 %s31, %s38
      %s91 = ssub.s32 %s30, %s42
      %s92 = sor.u32 %s90, %s91
      %p93 = scmp.eq.s32.totalorder %s92, 0
      %s95 = sadd.s32 %s94, 1
      %s96 = scalar_select %p93, %s94, %s95
      %p99 = pneg %p93
      %p100 = scmp.eq.s32.totalorder %s23, 3
      %p101 = por %p99, %p100
      %p102 = scmp.ne.s32.totalorder %s94, %s97
      %p103 = scmp.eq.s32.totalorder %s23, 0
      %p104 = por %p102, %p103
      %p105 = scmp.ne.s32.totalorder %s94, %s97
      %p106 = scmp.eq.s32.totalorder %s28, 3
      %p107 = por %p105, %p106
      %p108 = scmp.ne.s32.totalorder %s97, %s98
      %p109 = scmp.eq.s32.totalorder %s28, 0
      %p110 = por %p108, %p109
      %p111 = scmp.ne.s32.totalorder %s97, %s98
      %p112 = scmp.eq.s32.totalorder %s29, 3
      %p113 = por %p111, %p112
      %p115 = scmp.ne.s32.totalorder %s98, %s114
      %p116 = scmp.eq.s32.totalorder %s29, 0
      %p117 = por %p115, %p116
      %s118 = ssub.s32 %s30, %s42
      %p119 = scmp.eq.s32.totalorder %s118, 0
      %s121 = sadd.s32 %s120, 1
      %s122 = scalar_select %p119, %s120, %s121
      %p125 = pneg %p119
      %p126 = scmp.eq.s32.totalorder %s23, 3
      %p127 = por %p125, %p126
      %p128 = scmp.ne.s32.totalorder %s120, %s123
      %p129 = scmp.eq.s32.totalorder %s23, 0
      %p130 = por %p128, %p129
      %p131 = scmp.ne.s32.totalorder %s120, %s123
      %p132 = scmp.eq.s32.totalorder %s28, 3
      %p133 = por %p131, %p132
      %p134 = scmp.ne.s32.totalorder %s123, %s124
      %p135 = scmp.eq.s32.totalorder %s28, 0
      %p136 = por %p134, %p135
      %p137 = scmp.ne.s32.totalorder %s123, %s124
      %p138 = scmp.eq.s32.totalorder %s29, 3
      %p139 = por %p137, %p138
      %p141 = scmp.ne.s32.totalorder %s124, %s140
      %p142 = scmp.eq.s32.totalorder %s29, 0
      %p143 = por %p141, %p142
      %s144 = ssub.s32 %s30, %s42
      %p145 = scmp.eq.s32.totalorder %s144, 0
      %s147 = sadd.s32 %s146, 1
      %s148 = scalar_select %p145, %s146, %s147
      %p151 = pneg %p145
      %p152 = scmp.eq.s32.totalorder %s23, 3
      %p153 = por %p151, %p152
      %p154 = scmp.ne.s32.totalorder %s146, %s149
      %p155 = scmp.eq.s32.totalorder %s23, 0
      %p156 = por %p154, %p155
      %p157 = scmp.ne.s32.totalorder %s146, %s149
      %p158 = scmp.eq.s32.totalorder %s28, 3
      %p159 = por %p157, %p158
      %p160 = scmp.ne.s32.totalorder %s149, %s150
      %p161 = scmp.eq.s32.totalorder %s28, 0
      %p162 = por %p160, %p161
      %p163 = scmp.ne.s32.totalorder %s149, %s150
      %p164 = scmp.eq.s32.totalorder %s29, 3
      %p165 = por %p163, %p164
      %p167 = scmp.ne.s32.totalorder %s150, %s166
      %p168 = scmp.eq.s32.totalorder %s29, 0
      %p169 = por %p167, %p168
      %s170 = ssub.s32 %s30, %s42
      %p171 = scmp.eq.s32.totalorder %s170, 0
      %s173 = sadd.s32 %s172, 1
      %s174 = scalar_select %p171, %s172, %s173
      %p177 = pneg %p171
      %p178 = scmp.eq.s32.totalorder %s23, 3
      %p179 = por %p177, %p178
      %p180 = scmp.ne.s32.totalorder %s172, %s175
      %p181 = scmp.eq.s32.totalorder %s23, 0
      %p182 = por %p180, %p181
      %p183 = scmp.ne.s32.totalorder %s172, %s175
      %p184 = scmp.eq.s32.totalorder %s28, 3
      %p185 = por %p183, %p184
      %p186 = scmp.ne.s32.totalorder %s175, %s176
      %p187 = scmp.eq.s32.totalorder %s28, 0
      %p188 = por %p186, %p187
      %p189 = scmp.ne.s32.totalorder %s175, %s176
      %p190 = scmp.eq.s32.totalorder %s29, 3
      %p191 = por %p189, %p190
      %p193 = scmp.ne.s32.totalorder %s176, %s192
      %p194 = scmp.eq.s32.totalorder %s29, 0
      %p195 = por %p193, %p194
      %s196 = ssub.s32 %s30, %s42
      %p197 = scmp.eq.s32.totalorder %s196, 0
      %s199 = sadd.s32 %s198, 1
      %s200 = scalar_select %p197, %s198, %s199
      %p203 = pneg %p197
      %p204 = scmp.eq.s32.totalorder %s23, 3
      %p205 = por %p203, %p204
      %p206 = scmp.ne.s32.totalorder %s198, %s201
      %p207 = scmp.eq.s32.totalorder %s23, 0
      %p208 = por %p206, %p207
      %p209 = scmp.ne.s32.totalorder %s198, %s201
      %p210 = scmp.eq.s32.totalorder %s28, 3
      %p211 = por %p209, %p210
      %p212 = scmp.ne.s32.totalorder %s201, %s202
      %p213 = scmp.eq.s32.totalorder %s28, 0
      %p214 = por %p212, %p213
      %p215 = scmp.ne.s32.totalorder %s201, %s202
      %p216 = scmp.eq.s32.totalorder %s29, 3
      %p217 = por %p215, %p216
      %p219 = scmp.ne.s32.totalorder %s202, %s218
      %p220 = scmp.eq.s32.totalorder %s29, 0
      %p221 = por %p219, %p220
      %p222 = scmp.le.s32.totalorder 1, %s23
      %p223 = scmp.lt.s32.totalorder %s23, 5
      %p224 = pnand %p222, %p223
      %p225 = pneg %p224
      // Predicated region
      $region9: #{tpu_custom_call.1} parent=5 // pred_check
        _
      $region10: #{tpu_custom_call.1} parent=5 // pred_check_branch
        %227 = sbr.rel (%p224) target = $region12
      $region11: #{tpu_custom_call.1} parent=5 // pred_region
        %s228 = ssub.s32 %s23, 1
        // Predicated region
        $region13: #{tpu_custom_call.1} parent=11 // pred_check
          %p229 = pneg %p56
        $region14: #{tpu_custom_call.1} parent=11 // pred_check_branch
          %231 = sbr.rel (%p229) target = $region16
        $region15: #{tpu_custom_call.1} parent=11 // pred_region
          _
        $region16: #{tpu_custom_call.1} parent=11 // pred_fallthru
          _
        // Predicated region
        $region17: #{tpu_custom_call.1} parent=11 // pred_check
          %p232 = pneg %p82
        $region18: #{tpu_custom_call.1} parent=11 // pred_check_branch
          %234 = sbr.rel (%p232) target = $region20
        $region19: #{tpu_custom_call.1} parent=11 // pred_region
          %s236 = ssub.s32 256, 256
          %237 = vsyncadd [#allocation5], %s236
          %s238 = smul.addr %s33, 4
          %s239 = smul.addr %s238, 64
          %s240 = scalar_lea.hbm %s1, %s239
          %s242 = sshll.u32 [#allocation4], 4
          %s243 = int_to_ptr.vmem [resolvable:$true] %s242
          %245 = dma.hbm_to_vmem [thread:$0]  %s240, 256, %s243, [#allocation5]
        $region20: #{tpu_custom_call.1} parent=11 // pred_fallthru
          _
      $region12: #{tpu_custom_call.1} parent=5 // pred_fallthru
        _
      %p246 = scmp.lt.s32.totalorder %s23, 4
      // Predicated region
      $region21: #{tpu_custom_call.1} parent=5 // pred_check
        %p247 = pneg %p246
      $region22: #{tpu_custom_call.1} parent=5 // pred_check_branch
        %249 = sbr.rel (%p247) target = $region24
      $region23: #{tpu_custom_call.1} parent=5 // pred_region
        // Predicated region
        $region25: #{tpu_custom_call.1} parent=23 // pred_check
          %p250 = pneg %p104
        $region26: #{tpu_custom_call.1} parent=23 // pred_check_branch
          %252 = sbr.rel (%p250) target = $region28
        $region27: #{tpu_custom_call.1} parent=23 // pred_region
          %s253 = sand.u32 %s23, 1
          %s254 = scalar_lea.sflag [#allocation8], %s253
          %s255 = sand.u32 %s94, 1
          %s256 = smul.addr %s255, 192
          %s257 = scalar_lea.vmem [#allocation7], %s256
          %s258 = smul.u32 4, %s30
          %s260 = ssub.s32 3072, 3072
          %261 = vsyncadd %s254, %s260
          %s262 = smul.addr %s31, 96
          %s263 = sadd.s32 %s258, %s262
          %s264 = smul.addr %s263, 128
          %s265 = scalar_lea.hbm %s2, %s264
          %s266 = sshll.u32 %s257, 4
          %s267 = int_to_ptr.vmem [resolvable:$true] %s266
          %272 = dma.hbm_to_vmem [thread:$0]  %s265, 3072, %s267, %s254, 2048, 512, 32
        $region28: #{tpu_custom_call.1} parent=23 // pred_fallthru
          _
        // Predicated region
        $region29: #{tpu_custom_call.1} parent=23 // pred_check
          %p273 = pneg %p130
        $region30: #{tpu_custom_call.1} parent=23 // pred_check_branch
          %275 = sbr.rel (%p273) target = $region32
        $region31: #{tpu_custom_call.1} parent=23 // pred_region
          %s276 = sand.u32 %s23, 1
          %s277 = scalar_lea.sflag [#allocation8], %s276
          %s278 = sand.u32 %s120, 1
          %s279 = smul.addr %s278, 4
          %s280 = scalar_lea.vmem [#allocation9], %s279
          %s281 = smul.u32 4, %s30
          %s283 = ssub.s32 64, 64
          %284 = vsyncadd %s277, %s283
          %s285 = smul.addr %s281, 16
          %s286 = scalar_lea.hbm %s3, %s285
          %s288 = sshll.u32 %s280, 4
          %s289 = int_to_ptr.vmem [resolvable:$true] %s288
          %291 = dma.hbm_to_vmem [thread:$0]  %s286, 64, %s289, %s277
        $region32: #{tpu_custom_call.1} parent=23 // pred_fallthru
          _
        // Predicated region
        $region33: #{tpu_custom_call.1} parent=23 // pred_check
          %p292 = pneg %p156
        $region34: #{tpu_custom_call.1} parent=23 // pred_check_branch
          %294 = sbr.rel (%p292) target = $region36
        $region35: #{tpu_custom_call.1} parent=23 // pred_region
          %s295 = sand.u32 %s146, 1
          %s296 = scalar_lea.sflag [#allocation11], %s295
          %s297 = sand.u32 %s146, 1
          %s298 = smul.addr %s297, 4
          %s299 = scalar_lea.vmem [#allocation10], %s298
          %s300 = smul.u32 4, %s30
          %s302 = ssub.s32 64, 64
          %303 = vsyncadd %s296, %s302
          %s304 = smul.addr %s300, 16
          %s305 = scalar_lea.hbm %s4, %s304
          %s307 = sshll.u32 %s299, 4
          %s308 = int_to_ptr.vmem [resolvable:$true] %s307
          %310 = dma.hbm_to_vmem [thread:$0]  %s305, 64, %s308, %s296
        $region36: #{tpu_custom_call.1} parent=23 // pred_fallthru
          _
        // Predicated region
        $region37: #{tpu_custom_call.1} parent=23 // pred_check
          %p311 = pneg %p182
        $region38: #{tpu_custom_call.1} parent=23 // pred_check_branch
          %313 = sbr.rel (%p311) target = $region40
        $region39: #{tpu_custom_call.1} parent=23 // pred_region
          %s314 = smul.u32 4, %s30
          %p315 = scmp.lt.s32.totalorder %s314, 15
          %s316 = scalar_select %p315, %s314, 15
          %s317 = scalar_lea.vmem %s5, %s316
          %s318 = smul.u32 4, %s30
        $region40: #{tpu_custom_call.1} parent=23 // pred_fallthru
          _
      $region24: #{tpu_custom_call.1} parent=5 // pred_fallthru
        _
      %p319 = scmp.le.s32.totalorder 1, %s23
      %p320 = scmp.lt.s32.totalorder %s23, 5
      %p321 = pnand %p319, %p320
      %p322 = pneg %p321
      // Predicated region
      $region41: #{tpu_custom_call.1} parent=5 // pred_check
        _
      $region42: #{tpu_custom_call.1} parent=5 // pred_check_branch
        %324 = sbr.rel (%p321) target = $region44
      $region43: #{tpu_custom_call.1} parent=5 // pred_region
        %s325 = ssub.s32 %s23, 1
        // Predicated region
        $region45: #{tpu_custom_call.1} parent=43 // pred_check
          %p326 = pneg %p82
        $region46: #{tpu_custom_call.1} parent=43 // pred_check_branch
          %328 = sbr.rel (%p326) target = $region48
        $region47: #{tpu_custom_call.1} parent=43 // pred_region
          %329 = dma.done [#allocation5], 256
        $region48: #{tpu_custom_call.1} parent=43 // pred_fallthru
          _
        %s330 = sand.u32 %s28, 1
        %s331 = scalar_lea.sflag [#allocation8], %s330
        %s332 = sand.u32 %s97, 1
        %s333 = smul.addr %s332, 192
        %s334 = scalar_lea.vmem [#allocation7], %s333
        // Predicated region
        $region49: #{tpu_custom_call.1} parent=43 // pred_check
          %p335 = pneg %p110
        $region50: #{tpu_custom_call.1} parent=43 // pred_check_branch
          %337 = sbr.rel (%p335) target = $region52
        $region51: #{tpu_custom_call.1} parent=43 // pred_region
          %338 = dma.done %s331, 3072
        $region52: #{tpu_custom_call.1} parent=43 // pred_fallthru
          _
        %s339 = sand.u32 %s28, 1
        %s340 = scalar_lea.sflag [#allocation8], %s339
        %s341 = sand.u32 %s123, 1
        %s342 = smul.addr %s341, 4
        %s343 = scalar_lea.vmem [#allocation9], %s342
        // Predicated region
        $region53: #{tpu_custom_call.1} parent=43 // pred_check
          %p344 = pneg %p136
        $region54: #{tpu_custom_call.1} parent=43 // pred_check_branch
          %346 = sbr.rel (%p344) target = $region56
        $region55: #{tpu_custom_call.1} parent=43 // pred_region
          %347 = dma.done %s340, 64
        $region56: #{tpu_custom_call.1} parent=43 // pred_fallthru
          _
        %s348 = sand.u32 %s149, 1
        %s349 = scalar_lea.sflag [#allocation11], %s348
        %s350 = sand.u32 %s149, 1
        %s351 = smul.addr %s350, 4
        %s352 = scalar_lea.vmem [#allocation10], %s351
        // Predicated region
        $region57: #{tpu_custom_call.1} parent=43 // pred_check
          %p353 = pneg %p162
        $region58: #{tpu_custom_call.1} parent=43 // pred_check_branch
          %355 = sbr.rel (%p353) target = $region60
        $region59: #{tpu_custom_call.1} parent=43 // pred_region
          %356 = dma.done %s349, 64
        $region60: #{tpu_custom_call.1} parent=43 // pred_fallthru
          _
        %p357 = pneg %p56
        %p358 = pneg %p53
        %p359 = pneg %p82
        %p360 = pneg %p79
        %s361 = sand.u32 %s28, 1
        %s362 = scalar_lea.sflag [#allocation8], %s361
        %s363 = sand.u32 %s97, 1
        %s364 = smul.addr %s363, 192
        %s365 = scalar_lea.vmem [#allocation7], %s364
        %p366 = pneg %p110
        %p367 = pneg %p107
        %s368 = sand.u32 %s28, 1
        %s369 = scalar_lea.sflag [#allocation8], %s368
        %s370 = sand.u32 %s123, 1
        %s371 = smul.addr %s370, 4
        %s372 = scalar_lea.vmem [#allocation9], %s371
        %p373 = pneg %p136
        %p374 = pneg %p133
        %s375 = sand.u32 %s149, 1
        %s376 = scalar_lea.sflag [#allocation11], %s375
        %s377 = sand.u32 %s149, 1
        %s378 = smul.addr %s377, 4
        %s379 = scalar_lea.vmem [#allocation10], %s378
        %p380 = pneg %p162
        %p381 = pneg %p159
        %s382 = smul.u32 4, %s32
        %p383 = scmp.lt.s32.totalorder %s382, 15
        %s384 = scalar_select %p383, %s382, 15
        %s385 = scalar_lea.vmem %s5, %s384
        %p386 = pneg %p188
        %p387 = pneg %p185
        %p388 = pneg %p214
        %p389 = pneg %p211
        %s390 = sand.u32 %s201, 1
        %s391 = scalar_lea.sflag [#allocation6], %s390
        %s392 = sand.u32 %s201, 1
        %s393 = smul.addr %s392, 4
        %s394 = scalar_lea.vmem [#allocation12], %s393
        %s395 = smul.u32 4, %s32
        %s396 = smul.u32 4, %s32
        %s397 = smul.u32 4, %s32
        %s398 = smul.u32 4, %s32
        %p399 = scmp.lt.s32.totalorder %s398, 15
        %s400 = scalar_select %p399, %s398, 15
        %s401 = scalar_lea.vmem %s5, %s400
        %s402 = smul.u32 4, %s32
        %s403 = smul.u32 4, %s32
        %p404 = scmp.eq.s32.totalorder %s33, 0
        // Predicated region
        $region61: #{tpu_custom_call.1} parent=43 // pred_check
          %p405 = pneg %p404
        $region62: #{tpu_custom_call.1} parent=43 // pred_check_branch
          %407 = sbr.rel (%p405) target = $region64
        $region63: #{tpu_custom_call.1} parent=43 // pred_region
          %v408 = vlaneseq
          %vm409 = vcmp.ge.s32.totalorder %v408, 0
          %vm410 = vcmp.lt.s32.totalorder %v408, 512
          %vm411 = vmand %vm409, %vm410
          %412 = vst.msk [vmem:[%s394] sm:$0xf] %vm411, 0.0
        $region64: #{tpu_custom_call.1} parent=43 // pred_fallthru
          _
        %s413 = smul.u32 0, 4
        %s414 = smul.addr %s413, 8
        %s415 = scalar_lea.vmem %s334, %s414 [#allocation7]
        %v416 = vld [vmem:[%s415] sm:$0xff]
        %v417 = vld [vmem:[%s415 + $0x8] sm:$0xff]
        %v418 = vld [vmem:[%s415 + $0x10] sm:$0xff]
        %v419 = vld [vmem:[%s415 + $0x18] sm:$0xff]
        %s420 = sadd.s32 %s413, 8
        %s421 = smul.addr %s420, 8
        %s422 = scalar_lea.vmem %s334, %s421 [#allocation7]
        %v423 = vld [vmem:[%s422] sm:$0xff]
        %v424 = vld [vmem:[%s422 + $0x8] sm:$0xff]
        %v425 = vld [vmem:[%s422 + $0x10] sm:$0xff]
        %v426 = vld [vmem:[%s422 + $0x18] sm:$0xff]
        %s427 = sadd.s32 %s413, 16
        %s428 = smul.addr %s427, 8
        %s429 = scalar_lea.vmem %s334, %s428 [#allocation7]
        %v430 = vld [vmem:[%s429] sm:$0xff]
        %v431 = vld [vmem:[%s429 + $0x8] sm:$0xff]
        %v432 = vld [vmem:[%s429 + $0x10] sm:$0xff]
        %v433 = vld [vmem:[%s429 + $0x18] sm:$0xff]
        %v434 = vand.u32 %v416, 7
        %v435 = vand.u32 %v417, 7
        %v436 = vand.u32 %v418, 7
        %v437 = vand.u32 %v419, 7
        %v438 = vshra.s32 %v416, 3
        %v439 = vshra.s32 %v417, 3
        %v440 = vshra.s32 %v418, 3
        %v441 = vshra.s32 %v419, 3
        %v442 = vand.u32 %v438, 7
        %v443 = vand.u32 %v439, 7
        %v444 = vand.u32 %v440, 7
        %v445 = vand.u32 %v441, 7
        %v446 = vcvt.s32.f32 %v434
        %v447 = vcvt.s32.f32 %v435
        %v448 = vcvt.s32.f32 %v436
        %v449 = vcvt.s32.f32 %v437
        %v450 = vcvt.s32.f32 %v442
        %v451 = vcvt.s32.f32 %v443
        %v452 = vcvt.s32.f32 %v444
        %v453 = vcvt.s32.f32 %v445
        %v454 = vpack.c.bf16 %v450, %v446
        %v455 = vpack.c.bf16 %v451, %v447
        %v456 = vpack.c.bf16 %v452, %v448
        %v457 = vpack.c.bf16 %v453, %v449
        %458 = vst [vmem:[#allocation2] sm:$0xff] %v454
        %459 = vst [vmem:[#allocation2 + $0x8] sm:$0xff] %v455
        %460 = vst [vmem:[#allocation2 + $0x10] sm:$0xff] %v456
        %461 = vst [vmem:[#allocation2 + $0x18] sm:$0xff] %v457
        %v462 = vshra.s32 %v416, 6
        %v463 = vshra.s32 %v417, 6
        %v464 = vshra.s32 %v418, 6
        %v465 = vshra.s32 %v419, 6
        %v466 = vand.u32 %v462, 7
        %v467 = vand.u32 %v463, 7
        %v468 = vand.u32 %v464, 7
        %v469 = vand.u32 %v465, 7
        %v470 = vshra.s32 %v416, 9
        %v471 = vshra.s32 %v417, 9
        %v472 = vshra.s32 %v418, 9
        %v473 = vshra.s32 %v419, 9
        %v474 = vand.u32 %v470, 7
        %v475 = vand.u32 %v471, 7
        %v476 = vand.u32 %v472, 7
        %v477 = vand.u32 %v473, 7
        %v478 = vcvt.s32.f32 %v466
        %v479 = vcvt.s32.f32 %v467
        %v480 = vcvt.s32.f32 %v468
        %v481 = vcvt.s32.f32 %v469
        %v482 = vcvt.s32.f32 %v474
        %v483 = vcvt.s32.f32 %v475
        %v484 = vcvt.s32.f32 %v476
        %v485 = vcvt.s32.f32 %v477
        %v486 = vpack.c.bf16 %v482, %v478
        %v487 = vpack.c.bf16 %v483, %v479
        %v488 = vpack.c.bf16 %v484, %v480
        %v489 = vpack.c.bf16 %v485, %v481
        %490 = vst [vmem:[#allocation2 + $0x20] sm:$0xff] %v486
        %491 = vst [vmem:[#allocation2 + $0x28] sm:$0xff] %v487
        %492 = vst [vmem:[#allocation2 + $0x30] sm:$0xff] %v488
        %493 = vst [vmem:[#allocation2 + $0x38] sm:$0xff] %v489
        %v494 = vshra.s32 %v416, 12
        %v495 = vshra.s32 %v417, 12
        %v496 = vshra.s32 %v418, 12
        %v497 = vshra.s32 %v419, 12
        %v498 = vand.u32 %v494, 7
        %v499 = vand.u32 %v495, 7
        %v500 = vand.u32 %v496, 7
        %v501 = vand.u32 %v497, 7
        %v502 = vshra.s32 %v416, 15
        %v503 = vshra.s32 %v417, 15
        %v504 = vshra.s32 %v418, 15
        %v505 = vshra.s32 %v419, 15
        %v506 = vand.u32 %v502, 7
        %v507 = vand.u32 %v503, 7
        %v508 = vand.u32 %v504, 7
        %v509 = vand.u32 %v505, 7
        %v510 = vcvt.s32.f32 %v498
        %v511 = vcvt.s32.f32 %v499
        %v512 = vcvt.s32.f32 %v500
        %v513 = vcvt.s32.f32 %v501
        %v514 = vcvt.s32.f32 %v506
        %v515 = vcvt.s32.f32 %v507
        %v516 = vcvt.s32.f32 %v508
        %v517 = vcvt.s32.f32 %v509
        %v518 = vpack.c.bf16 %v514, %v510
        %v519 = vpack.c.bf16 %v515, %v511
        %v520 = vpack.c.bf16 %v516, %v512
        %v521 = vpack.c.bf16 %v517, %v513
        %522 = vst [vmem:[#allocation2 + $0x40] sm:$0xff] %v518
        %523 = vst [vmem:[#allocation2 + $0x48] sm:$0xff] %v519
        %524 = vst [vmem:[#allocation2 + $0x50] sm:$0xff] %v520
        %525 = vst [vmem:[#allocation2 + $0x58] sm:$0xff] %v521
        %v526 = vshra.s32 %v416, 18
        %v527 = vshra.s32 %v417, 18
        %v528 = vshra.s32 %v418, 18
        %v529 = vshra.s32 %v419, 18
        %v530 = vand.u32 %v526, 7
        %v531 = vand.u32 %v527, 7
        %v532 = vand.u32 %v528, 7
        %v533 = vand.u32 %v529, 7
        %v534 = vshra.s32 %v416, 21
        %v535 = vshra.s32 %v417, 21
        %v536 = vshra.s32 %v418, 21
        %v537 = vshra.s32 %v419, 21
        %v538 = vand.u32 %v534, 7
        %v539 = vand.u32 %v535, 7
        %v540 = vand.u32 %v536, 7
        %v541 = vand.u32 %v537, 7
        %v542 = vcvt.s32.f32 %v530
        %v543 = vcvt.s32.f32 %v531
        %v544 = vcvt.s32.f32 %v532
        %v545 = vcvt.s32.f32 %v533
        %v546 = vcvt.s32.f32 %v538
        %v547 = vcvt.s32.f32 %v539
        %v548 = vcvt.s32.f32 %v540
        %v549 = vcvt.s32.f32 %v541
        %v550 = vpack.c.bf16 %v546, %v542
        %v551 = vpack.c.bf16 %v547, %v543
        %v552 = vpack.c.bf16 %v548, %v544
        %v553 = vpack.c.bf16 %v549, %v545
        %554 = vst [vmem:[#allocation2 + $0x60] sm:$0xff] %v550
        %555 = vst [vmem:[#allocation2 + $0x68] sm:$0xff] %v551
        %556 = vst [vmem:[#allocation2 + $0x70] sm:$0xff] %v552
        %557 = vst [vmem:[#allocation2 + $0x78] sm:$0xff] %v553
        %v558 = vshra.s32 %v416, 24
        %v559 = vshra.s32 %v417, 24
        %v560 = vshra.s32 %v418, 24
        %v561 = vshra.s32 %v419, 24
        %v562 = vand.u32 %v558, 7
        %v563 = vand.u32 %v559, 7
        %v564 = vand.u32 %v560, 7
        %v565 = vand.u32 %v561, 7
        %v566 = vshra.s32 %v416, 27
        %v567 = vshra.s32 %v417, 27
        %v568 = vshra.s32 %v418, 27
        %v569 = vshra.s32 %v419, 27
        %v570 = vand.u32 %v566, 7
        %v571 = vand.u32 %v567, 7
        %v572 = vand.u32 %v568, 7
        %v573 = vand.u32 %v569, 7
        %v574 = vcvt.s32.f32 %v562
        %v575 = vcvt.s32.f32 %v563
        %v576 = vcvt.s32.f32 %v564
        %v577 = vcvt.s32.f32 %v565
        %v578 = vcvt.s32.f32 %v570
        %v579 = vcvt.s32.f32 %v571
        %v580 = vcvt.s32.f32 %v572
        %v581 = vcvt.s32.f32 %v573
        %v582 = vpack.c.bf16 %v578, %v574
        %v583 = vpack.c.bf16 %v579, %v575
        %v584 = vpack.c.bf16 %v580, %v576
        %v585 = vpack.c.bf16 %v581, %v577
        %586 = vst [vmem:[#allocation2 + $0x80] sm:$0xff] %v582
        %587 = vst [vmem:[#allocation2 + $0x88] sm:$0xff] %v583
        %588 = vst [vmem:[#allocation2 + $0x90] sm:$0xff] %v584
        %589 = vst [vmem:[#allocation2 + $0x98] sm:$0xff] %v585
        %v590 = vshra.s32 %v416, 30
        %v591 = vshra.s32 %v417, 30
        %v592 = vshra.s32 %v418, 30
        %v593 = vshra.s32 %v419, 30
        %v594 = vand.u32 %v590, 3
        %v595 = vand.u32 %v591, 3
        %v596 = vand.u32 %v592, 3
        %v597 = vand.u32 %v593, 3
        %v598 = vand.u32 %v423, 1
        %v599 = vand.u32 %v424, 1
        %v600 = vand.u32 %v425, 1
        %v601 = vand.u32 %v426, 1
        %v602 = vshll.u32 %v598, 2
        %v603 = vshll.u32 %v599, 2
        %v604 = vshll.u32 %v600, 2
        %v605 = vshll.u32 %v601, 2
        %v606 = vor.u32 %v594, %v602
        %v607 = vor.u32 %v595, %v603
        %v608 = vor.u32 %v596, %v604
        %v609 = vor.u32 %v597, %v605
        %v610 = vshra.s32 %v423, 1
        %v611 = vshra.s32 %v424, 1
        %v612 = vshra.s32 %v425, 1
        %v613 = vshra.s32 %v426, 1
        %v614 = vand.u32 %v610, 7
        %v615 = vand.u32 %v611, 7
        %v616 = vand.u32 %v612, 7
        %v617 = vand.u32 %v613, 7
        %v618 = vcvt.s32.f32 %v606
        %v619 = vcvt.s32.f32 %v607
        %v620 = vcvt.s32.f32 %v608
        %v621 = vcvt.s32.f32 %v609
        %v622 = vcvt.s32.f32 %v614
        %v623 = vcvt.s32.f32 %v615
        %v624 = vcvt.s32.f32 %v616
        %v625 = vcvt.s32.f32 %v617
        %v626 = vpack.c.bf16 %v622, %v618
        %v627 = vpack.c.bf16 %v623, %v619
        %v628 = vpack.c.bf16 %v624, %v620
        %v629 = vpack.c.bf16 %v625, %v621
        %630 = vst [vmem:[#allocation2 + $0xa0] sm:$0xff] %v626
        %631 = vst [vmem:[#allocation2 + $0xa8] sm:$0xff] %v627
        %632 = vst [vmem:[#allocation2 + $0xb0] sm:$0xff] %v628
        %633 = vst [vmem:[#allocation2 + $0xb8] sm:$0xff] %v629
        %v634 = vshra.s32 %v423, 4
        %v635 = vshra.s32 %v424, 4
        %v636 = vshra.s32 %v425, 4
        %v637 = vshra.s32 %v426, 4
        %v638 = vand.u32 %v634, 7
        %v639 = vand.u32 %v635, 7
        %v640 = vand.u32 %v636, 7
        %v641 = vand.u32 %v637, 7
        %v642 = vshra.s32 %v423, 7
        %v643 = vshra.s32 %v424, 7
        %v644 = vshra.s32 %v425, 7
        %v645 = vshra.s32 %v426, 7
        %v646 = vand.u32 %v642, 7
        %v647 = vand.u32 %v643, 7
        %v648 = vand.u32 %v644, 7
        %v649 = vand.u32 %v645, 7
        %v650 = vcvt.s32.f32 %v638
        %v651 = vcvt.s32.f32 %v639
        %v652 = vcvt.s32.f32 %v640
        %v653 = vcvt.s32.f32 %v641
        %v654 = vcvt.s32.f32 %v646
        %v655 = vcvt.s32.f32 %v647
        %v656 = vcvt.s32.f32 %v648
        %v657 = vcvt.s32.f32 %v649
        %v658 = vpack.c.bf16 %v654, %v650
        %v659 = vpack.c.bf16 %v655, %v651
        %v660 = vpack.c.bf16 %v656, %v652
        %v661 = vpack.c.bf16 %v657, %v653
        %662 = vst [vmem:[#allocation2 + $0xc0] sm:$0xff] %v658
        %663 = vst [vmem:[#allocation2 + $0xc8] sm:$0xff] %v659
        %664 = vst [vmem:[#allocation2 + $0xd0] sm:$0xff] %v660
        %665 = vst [vmem:[#allocation2 + $0xd8] sm:$0xff] %v661
        %v666 = vshra.s32 %v423, 10
        %v667 = vshra.s32 %v424, 10
        %v668 = vshra.s32 %v425, 10
        %v669 = vshra.s32 %v426, 10
        %v670 = vand.u32 %v666, 7
        %v671 = vand.u32 %v667, 7
        %v672 = vand.u32 %v668, 7
        %v673 = vand.u32 %v669, 7
        %v674 = vshra.s32 %v423, 13
        %v675 = vshra.s32 %v424, 13
        %v676 = vshra.s32 %v425, 13
        %v677 = vshra.s32 %v426, 13
        %v678 = vand.u32 %v674, 7
        %v679 = vand.u32 %v675, 7
        %v680 = vand.u32 %v676, 7
        %v681 = vand.u32 %v677, 7
        %v682 = vcvt.s32.f32 %v670
        %v683 = vcvt.s32.f32 %v671
        %v684 = vcvt.s32.f32 %v672
        %v685 = vcvt.s32.f32 %v673
        %v686 = vcvt.s32.f32 %v678
        %v687 = vcvt.s32.f32 %v679
        %v688 = vcvt.s32.f32 %v680
        %v689 = vcvt.s32.f32 %v681
        %v690 = vpack.c.bf16 %v686, %v682
        %v691 = vpack.c.bf16 %v687, %v683
        %v692 = vpack.c.bf16 %v688, %v684
        %v693 = vpack.c.bf16 %v689, %v685
        %694 = vst [vmem:[#allocation2 + $0xe0] sm:$0xff] %v690
        %695 = vst [vmem:[#allocation2 + $0xe8] sm:$0xff] %v691
        %696 = vst [vmem:[#allocation2 + $0xf0] sm:$0xff] %v692
        %697 = vst [vmem:[#allocation2 + $0xf8] sm:$0xff] %v693
        %v698 = vshra.s32 %v423, 16
        %v699 = vshra.s32 %v424, 16
        %v700 = vshra.s32 %v425, 16
        %v701 = vshra.s32 %v426, 16
        %v702 = vand.u32 %v698, 7
        %v703 = vand.u32 %v699, 7
        %v704 = vand.u32 %v700, 7
        %v705 = vand.u32 %v701, 7
        %v706 = vshra.s32 %v423, 19
        %v707 = vshra.s32 %v424, 19
        %v708 = vshra.s32 %v425, 19
        %v709 = vshra.s32 %v426, 19
        %v710 = vand.u32 %v706, 7
        %v711 = vand.u32 %v707, 7
        %v712 = vand.u32 %v708, 7
        %v713 = vand.u32 %v709, 7
        %v714 = vcvt.s32.f32 %v702
        %v715 = vcvt.s32.f32 %v703
        %v716 = vcvt.s32.f32 %v704
        %v717 = vcvt.s32.f32 %v705
        %v718 = vcvt.s32.f32 %v710
        %v719 = vcvt.s32.f32 %v711
        %v720 = vcvt.s32.f32 %v712
        %v721 = vcvt.s32.f32 %v713
        %v722 = vpack.c.bf16 %v718, %v714
        %v723 = vpack.c.bf16 %v719, %v715
        %v724 = vpack.c.bf16 %v720, %v716
        %v725 = vpack.c.bf16 %v721, %v717
        %726 = vst [vmem:[#allocation2 + $0x100] sm:$0xff] %v722
        %727 = vst [vmem:[#allocation2 + $0x108] sm:$0xff] %v723
        %728 = vst [vmem:[#allocation2 + $0x110] sm:$0xff] %v724
        %729 = vst [vmem:[#allocation2 + $0x118] sm:$0xff] %v725
        %v730 = vshra.s32 %v423, 22
        %v731 = vshra.s32 %v424, 22
        %v732 = vshra.s32 %v425, 22
        %v733 = vshra.s32 %v426, 22
        %v734 = vand.u32 %v730, 7
        %v735 = vand.u32 %v731, 7
        %v736 = vand.u32 %v732, 7
        %v737 = vand.u32 %v733, 7
        %v738 = vshra.s32 %v423, 25
        %v739 = vshra.s32 %v424, 25
        %v740 = vshra.s32 %v425, 25
        %v741 = vshra.s32 %v426, 25
        %v742 = vand.u32 %v738, 7
        %v743 = vand.u32 %v739, 7
        %v744 = vand.u32 %v740, 7
        %v745 = vand.u32 %v741, 7
        %v746 = vcvt.s32.f32 %v734
        %v747 = vcvt.s32.f32 %v735
        %v748 = vcvt.s32.f32 %v736
        %v749 = vcvt.s32.f32 %v737
        %v750 = vcvt.s32.f32 %v742
        %v751 = vcvt.s32.f32 %v743
        %v752 = vcvt.s32.f32 %v744
        %v753 = vcvt.s32.f32 %v745
        %v754 = vpack.c.bf16 %v750, %v746
        %v755 = vpack.c.bf16 %v751, %v747
        %v756 = vpack.c.bf16 %v752, %v748
        %v757 = vpack.c.bf16 %v753, %v749
        %758 = vst [vmem:[#allocation2 + $0x120] sm:$0xff] %v754
        %759 = vst [vmem:[#allocation2 + $0x128] sm:$0xff] %v755
        %760 = vst [vmem:[#allocation2 + $0x130] sm:$0xff] %v756
        %761 = vst [vmem:[#allocation2 + $0x138] sm:$0xff] %v757
        %v762 = vshra.s32 %v423, 28
        %v763 = vshra.s32 %v424, 28
        %v764 = vshra.s32 %v425, 28
        %v765 = vshra.s32 %v426, 28
        %v766 = vand.u32 %v762, 7
        %v767 = vand.u32 %v763, 7
        %v768 = vand.u32 %v764, 7
        %v769 = vand.u32 %v765, 7
        %v770 = vshra.s32 %v423, 31
        %v771 = vshra.s32 %v424, 31
        %v772 = vshra.s32 %v425, 31
        %v773 = vshra.s32 %v426, 31
        %v774 = vand.u32 %v770, 1
        %v775 = vand.u32 %v771, 1
        %v776 = vand.u32 %v772, 1
        %v777 = vand.u32 %v773, 1
        %v778 = vand.u32 %v430, 3
        %v779 = vand.u32 %v431, 3
        %v780 = vand.u32 %v432, 3
        %v781 = vand.u32 %v433, 3
        %v782 = vshll.u32 %v778, 1
        %v783 = vshll.u32 %v779, 1
        %v784 = vshll.u32 %v780, 1
        %v785 = vshll.u32 %v781, 1
        %v786 = vor.u32 %v774, %v782
        %v787 = vor.u32 %v775, %v783
        %v788 = vor.u32 %v776, %v784
        %v789 = vor.u32 %v777, %v785
        %v790 = vcvt.s32.f32 %v766
        %v791 = vcvt.s32.f32 %v767
        %v792 = vcvt.s32.f32 %v768
        %v793 = vcvt.s32.f32 %v769
        %v794 = vcvt.s32.f32 %v786
        %v795 = vcvt.s32.f32 %v787
        %v796 = vcvt.s32.f32 %v788
        %v797 = vcvt.s32.f32 %v789
        %v798 = vpack.c.bf16 %v794, %v790
        %v799 = vpack.c.bf16 %v795, %v791
        %v800 = vpack.c.bf16 %v796, %v792
        %v801 = vpack.c.bf16 %v797, %v793
        %802 = vst [vmem:[#allocation2 + $0x140] sm:$0xff] %v798
        %803 = vst [vmem:[#allocation2 + $0x148] sm:$0xff] %v799
        %804 = vst [vmem:[#allocation2 + $0x150] sm:$0xff] %v800
        %805 = vst [vmem:[#allocation2 + $0x158] sm:$0xff] %v801
        %v806 = vshra.s32 %v430, 2
        %v807 = vshra.s32 %v431, 2
        %v808 = vshra.s32 %v432, 2
        %v809 = vshra.s32 %v433, 2
        %v810 = vand.u32 %v806, 7
        %v811 = vand.u32 %v807, 7
        %v812 = vand.u32 %v808, 7
        %v813 = vand.u32 %v809, 7
        %v814 = vshra.s32 %v430, 5
        %v815 = vshra.s32 %v431, 5
        %v816 = vshra.s32 %v432, 5
        %v817 = vshra.s32 %v433, 5
        %v818 = vand.u32 %v814, 7
        %v819 = vand.u32 %v815, 7
        %v820 = vand.u32 %v816, 7
        %v821 = vand.u32 %v817, 7
        %v822 = vcvt.s32.f32 %v810
        %v823 = vcvt.s32.f32 %v811
        %v824 = vcvt.s32.f32 %v812
        %v825 = vcvt.s32.f32 %v813
        %v826 = vcvt.s32.f32 %v818
        %v827 = vcvt.s32.f32 %v819
        %v828 = vcvt.s32.f32 %v820
        %v829 = vcvt.s32.f32 %v821
        %v830 = vpack.c.bf16 %v826, %v822
        %v831 = vpack.c.bf16 %v827, %v823
        %v832 = vpack.c.bf16 %v828, %v824
        %v833 = vpack.c.bf16 %v829, %v825
        %834 = vst [vmem:[#allocation2 + $0x160] sm:$0xff] %v830
        %835 = vst [vmem:[#allocation2 + $0x168] sm:$0xff] %v831
        %836 = vst [vmem:[#allocation2 + $0x170] sm:$0xff] %v832
        %837 = vst [vmem:[#allocation2 + $0x178] sm:$0xff] %v833
        %v838 = vshra.s32 %v430, 8
        %v839 = vshra.s32 %v431, 8
        %v840 = vshra.s32 %v432, 8
        %v841 = vshra.s32 %v433, 8
        %v842 = vand.u32 %v838, 7
        %v843 = vand.u32 %v839, 7
        %v844 = vand.u32 %v840, 7
        %v845 = vand.u32 %v841, 7
        %v846 = vshra.s32 %v430, 11
        %v847 = vshra.s32 %v431, 11
        %v848 = vshra.s32 %v432, 11
        %v849 = vshra.s32 %v433, 11
        %v850 = vand.u32 %v846, 7
        %v851 = vand.u32 %v847, 7
        %v852 = vand.u32 %v848, 7
        %v853 = vand.u32 %v849, 7
        %v854 = vcvt.s32.f32 %v842
        %v855 = vcvt.s32.f32 %v843
        %v856 = vcvt.s32.f32 %v844
        %v857 = vcvt.s32.f32 %v845
        %v858 = vcvt.s32.f32 %v850
        %v859 = vcvt.s32.f32 %v851
        %v860 = vcvt.s32.f32 %v852
        %v861 = vcvt.s32.f32 %v853
        %v862 = vpack.c.bf16 %v858, %v854
        %v863 = vpack.c.bf16 %v859, %v855
        %v864 = vpack.c.bf16 %v860, %v856
        %v865 = vpack.c.bf16 %v861, %v857
        %866 = vst [vmem:[#allocation2 + $0x180] sm:$0xff] %v862
        %867 = vst [vmem:[#allocation2 + $0x188] sm:$0xff] %v863
        %868 = vst [vmem:[#allocation2 + $0x190] sm:$0xff] %v864
        %869 = vst [vmem:[#allocation2 + $0x198] sm:$0xff] %v865
        %v870 = vshra.s32 %v430, 14
        %v871 = vshra.s32 %v431, 14
        %v872 = vshra.s32 %v432, 14
        %v873 = vshra.s32 %v433, 14
        %v874 = vand.u32 %v870, 7
        %v875 = vand.u32 %v871, 7
        %v876 = vand.u32 %v872, 7
        %v877 = vand.u32 %v873, 7
        %v878 = vshra.s32 %v430, 17
        %v879 = vshra.s32 %v431, 17
        %v880 = vshra.s32 %v432, 17
        %v881 = vshra.s32 %v433, 17
        %v882 = vand.u32 %v878, 7
        %v883 = vand.u32 %v879, 7
        %v884 = vand.u32 %v880, 7
        %v885 = vand.u32 %v881, 7
        %v886 = vcvt.s32.f32 %v874
        %v887 = vcvt.s32.f32 %v875
        %v888 = vcvt.s32.f32 %v876
        %v889 = vcvt.s32.f32 %v877
        %v890 = vcvt.s32.f32 %v882
        %v891 = vcvt.s32.f32 %v883
        %v892 = vcvt.s32.f32 %v884
        %v893 = vcvt.s32.f32 %v885
        %v894 = vpack.c.bf16 %v890, %v886
        %v895 = vpack.c.bf16 %v891, %v887
        %v896 = vpack.c.bf16 %v892, %v888
        %v897 = vpack.c.bf16 %v893, %v889
        %898 = vst [vmem:[#allocation2 + $0x1a0] sm:$0xff] %v894
        %899 = vst [vmem:[#allocation2 + $0x1a8] sm:$0xff] %v895
        %900 = vst [vmem:[#allocation2 + $0x1b0] sm:$0xff] %v896
        %901 = vst [vmem:[#allocation2 + $0x1b8] sm:$0xff] %v897
        %v902 = vshra.s32 %v430, 20
        %v903 = vshra.s32 %v431, 20
        %v904 = vshra.s32 %v432, 20
        %v905 = vshra.s32 %v433, 20
        %v906 = vand.u32 %v902, 7
        %v907 = vand.u32 %v903, 7
        %v908 = vand.u32 %v904, 7
        %v909 = vand.u32 %v905, 7
        %v910 = vshra.s32 %v430, 23
        %v911 = vshra.s32 %v431, 23
        %v912 = vshra.s32 %v432, 23
        %v913 = vshra.s32 %v433, 23
        %v914 = vand.u32 %v910, 7
        %v915 = vand.u32 %v911, 7
        %v916 = vand.u32 %v912, 7
        %v917 = vand.u32 %v913, 7
        %v918 = vcvt.s32.f32 %v906
        %v919 = vcvt.s32.f32 %v907
        %v920 = vcvt.s32.f32 %v908
        %v921 = vcvt.s32.f32 %v909
        %v922 = vcvt.s32.f32 %v914
        %v923 = vcvt.s32.f32 %v915
        %v924 = vcvt.s32.f32 %v916
        %v925 = vcvt.s32.f32 %v917
        %v926 = vpack.c.bf16 %v922, %v918
        %v927 = vpack.c.bf16 %v923, %v919
        %v928 = vpack.c.bf16 %v924, %v920
        %v929 = vpack.c.bf16 %v925, %v921
        %930 = vst [vmem:[#allocation2 + $0x1c0] sm:$0xff] %v926
        %931 = vst [vmem:[#allocation2 + $0x1c8] sm:$0xff] %v927
        %932 = vst [vmem:[#allocation2 + $0x1d0] sm:$0xff] %v928
        %933 = vst [vmem:[#allocation2 + $0x1d8] sm:$0xff] %v929
        %v934 = vshra.s32 %v430, 26
        %v935 = vshra.s32 %v431, 26
        %v936 = vshra.s32 %v432, 26
        %v937 = vshra.s32 %v433, 26
        %v938 = vand.u32 %v934, 7
        %v939 = vand.u32 %v935, 7
        %v940 = vand.u32 %v936, 7
        %v941 = vand.u32 %v937, 7
        %v942 = vshra.s32 %v430, 29
        %v943 = vshra.s32 %v431, 29
        %v944 = vshra.s32 %v432, 29
        %v945 = vshra.s32 %v433, 29
        %v946 = vand.u32 %v942, 7
        %v947 = vand.u32 %v943, 7
        %v948 = vand.u32 %v944, 7
        %v949 = vand.u32 %v945, 7
        %v950 = vcvt.s32.f32 %v938
        %v951 = vcvt.s32.f32 %v939
        %v952 = vcvt.s32.f32 %v940
        %v953 = vcvt.s32.f32 %v941
        %v954 = vcvt.s32.f32 %v946
        %v955 = vcvt.s32.f32 %v947
        %v956 = vcvt.s32.f32 %v948
        %v957 = vcvt.s32.f32 %v949
        %v958 = vpack.c.bf16 %v954, %v950
        %v959 = vpack.c.bf16 %v955, %v951
        %v960 = vpack.c.bf16 %v956, %v952
        %v961 = vpack.c.bf16 %v957, %v953
        %962 = vst [vmem:[#allocation2 + $0x1e0] sm:$0xff] %v958
        %963 = vst [vmem:[#allocation2 + $0x1e8] sm:$0xff] %v959
        %964 = vst [vmem:[#allocation2 + $0x1f0] sm:$0xff] %v960
        %965 = vst [vmem:[#allocation2 + $0x1f8] sm:$0xff] %v961
        %v966 = vld [vmem:[#allocation4] sm:$0xff]
        %v967 = vld [vmem:[#allocation2] sm:$0xff]
        %v968 = vld [vmem:[#allocation2 + $0x8] sm:$0xff]
        %v969 = vld [vmem:[#allocation2 + $0x10] sm:$0xff]
        %v970 = vld [vmem:[#allocation2 + $0x18] sm:$0xff]
        %v971 = vld [vmem:[#allocation2 + $0x20] sm:$0xff]
        %v972 = vld [vmem:[#allocation2 + $0x28] sm:$0xff]
        %v973 = vld [vmem:[#allocation2 + $0x30] sm:$0xff]
        %v974 = vld [vmem:[#allocation2 + $0x38] sm:$0xff]
        %v975 = vld [vmem:[#allocation2 + $0x40] sm:$0xff]
        %v976 = vld [vmem:[#allocation2 + $0x48] sm:$0xff]
        %v977 = vld [vmem:[#allocation2 + $0x50] sm:$0xff]
        %v978 = vld [vmem:[#allocation2 + $0x58] sm:$0xff]
        %v979 = vld [vmem:[#allocation2 + $0x60] sm:$0xff]
        %v980 = vld [vmem:[#allocation2 + $0x68] sm:$0xff]
        %v981 = vld [vmem:[#allocation2 + $0x70] sm:$0xff]
        %v982 = vld [vmem:[#allocation2 + $0x78] sm:$0xff]
        %v983 = vld [vmem:[#allocation2 + $0x80] sm:$0xff]
        %v984 = vld [vmem:[#allocation2 + $0x88] sm:$0xff]
        %v985 = vld [vmem:[#allocation2 + $0x90] sm:$0xff]
        %v986 = vld [vmem:[#allocation2 + $0x98] sm:$0xff]
        %v987 = vld [vmem:[#allocation2 + $0xa0] sm:$0xff]
        %v988 = vld [vmem:[#allocation2 + $0xa8] sm:$0xff]
        %v989 = vld [vmem:[#allocation2 + $0xb0] sm:$0xff]
        %v990 = vld [vmem:[#allocation2 + $0xb8] sm:$0xff]
        %v991 = vld [vmem:[#allocation2 + $0xc0] sm:$0xff]
        %v992 = vld [vmem:[#allocation2 + $0xc8] sm:$0xff]
        %v993 = vld [vmem:[#allocation2 + $0xd0] sm:$0xff]
        %v994 = vld [vmem:[#allocation2 + $0xd8] sm:$0xff]
        %v995 = vld [vmem:[#allocation2 + $0xe0] sm:$0xff]
        %v996 = vld [vmem:[#allocation2 + $0xe8] sm:$0xff]
        %v997 = vld [vmem:[#allocation2 + $0xf0] sm:$0xff]
        %v998 = vld [vmem:[#allocation2 + $0xf8] sm:$0xff]
        %v999 = vld [vmem:[#allocation2 + $0x100] sm:$0xff]
        %v1000 = vld [vmem:[#allocation2 + $0x108] sm:$0xff]
        %v1001 = vld [vmem:[#allocation2 + $0x110] sm:$0xff]
        %v1002 = vld [vmem:[#allocation2 + $0x118] sm:$0xff]
        %v1003 = vld [vmem:[#allocation2 + $0x120] sm:$0xff]
        %v1004 = vld [vmem:[#allocation2 + $0x128] sm:$0xff]
        %v1005 = vld [vmem:[#allocation2 + $0x130] sm:$0xff]
        %v1006 = vld [vmem:[#allocation2 + $0x138] sm:$0xff]
        %v1007 = vld [vmem:[#allocation2 + $0x140] sm:$0xff]
        %v1008 = vld [vmem:[#allocation2 + $0x148] sm:$0xff]
        %v1009 = vld [vmem:[#allocation2 + $0x150] sm:$0xff]
        %v1010 = vld [vmem:[#allocation2 + $0x158] sm:$0xff]
        %v1011 = vld [vmem:[#allocation2 + $0x160] sm:$0xff]
        %v1012 = vld [vmem:[#allocation2 + $0x168] sm:$0xff]
        %v1013 = vld [vmem:[#allocation2 + $0x170] sm:$0xff]
        %v1014 = vld [vmem:[#allocation2 + $0x178] sm:$0xff]
        %v1015 = vld [vmem:[#allocation2 + $0x180] sm:$0xff]
        %v1016 = vld [vmem:[#allocation2 + $0x188] sm:$0xff]
        %v1017 = vld [vmem:[#allocation2 + $0x190] sm:$0xff]
        %v1018 = vld [vmem:[#allocation2 + $0x198] sm:$0xff]
        %v1019 = vld [vmem:[#allocation2 + $0x1a0] sm:$0xff]
        %v1020 = vld [vmem:[#allocation2 + $0x1a8] sm:$0xff]
        %v1021 = vld [vmem:[#allocation2 + $0x1b0] sm:$0xff]
        %v1022 = vld [vmem:[#allocation2 + $0x1b8] sm:$0xff]
        %v1023 = vld [vmem:[#allocation2 + $0x1c0] sm:$0xff]
        %v1024 = vld [vmem:[#allocation2 + $0x1c8] sm:$0xff]
        %v1025 = vld [vmem:[#allocation2 + $0x1d0] sm:$0xff]
        %v1026 = vld [vmem:[#allocation2 + $0x1d8] sm:$0xff]
        %v1027 = vld [vmem:[#allocation2 + $0x1e0] sm:$0xff]
        %v1028 = vld [vmem:[#allocation2 + $0x1e8] sm:$0xff]
        %v1029 = vld [vmem:[#allocation2 + $0x1f0] sm:$0xff]
        %v1030 = vld [vmem:[#allocation2 + $0x1f8] sm:$0xff]
        %v1032 = vunpack.c.l.b16 %v966
        %v1033 = vunpack.c.h.b16 %v966
        %v1034 = vpack.c.b16 %v1032, %v1032
        %v1035 = vpack.c.b16 %v1033, %v1033
        %1038 = vmatprep.subr.bf16.mxu0 %v968
        %1039 = vmatpush1.bf16.msra.mxu0 %v967
        %1040 = vmatprep.subr.bf16.mxu0 %v972
        %1041 = vmatpush1.bf16.msra.mxu0 %v971
        %1042 = vmatprep.subr.bf16.mxu0 %v976
        %1043 = vmatpush1.bf16.msra.mxu0 %v975
        %1044 = vmatprep.subr.bf16.mxu0 %v980
        %1045 = vmatpush1.bf16.msra.mxu0 %v979
        %1046 = vmatprep.subr.bf16.mxu0 %v984
        %1047 = vmatpush1.bf16.msra.mxu0 %v983
        %1048 = vmatprep.subr.bf16.mxu0 %v988
        %1049 = vmatpush1.bf16.msra.mxu0 %v987
        %1050 = vmatprep.subr.bf16.mxu0 %v992
        %1051 = vmatpush1.bf16.msra.mxu0 %v991
        %1052 = vmatprep.subr.bf16.mxu0 %v996
        %1053 = vmatpush1.bf16.msra.mxu0 %v995
        %1054 = vmatprep.subr.bf16.mxu0 %v1000
        %1055 = vmatpush1.bf16.msra.mxu0 %v999
        %1056 = vmatprep.subr.bf16.mxu0 %v1004
        %1057 = vmatpush1.bf16.msra.mxu0 %v1003
        %1058 = vmatprep.subr.bf16.mxu0 %v1008
        %1059 = vmatpush1.bf16.msra.mxu0 %v1007
        %1060 = vmatprep.subr.bf16.mxu0 %v1012
        %1061 = vmatpush1.bf16.msra.mxu0 %v1011
        %1062 = vmatprep.subr.bf16.mxu0 %v1016
        %1063 = vmatpush1.bf16.msra.mxu0 %v1015
        %1064 = vmatprep.subr.bf16.mxu0 %v1020
        %1065 = vmatpush1.bf16.msra.mxu0 %v1019
        %1066 = vmatprep.subr.bf16.mxu0 %v1024
        %1067 = vmatpush1.bf16.msra.mxu0 %v1023
        %1068 = vmatprep.subr.bf16.mxu0 %v1028
        %1069 = vmatpush1.bf16.msra.mxu0 %v1027
        %1070 = vmatprep.mubr.bf16.mxu0 %v1035
        %1071 = vmatmul.mubr.bf16.gmra.mrb[0].mxu0 %v1034
        %v1072 = vpop.f32.mrb[0].mxu0
        %v1073 = vadd.f32 0.0, %v1072
        %v1074 = vpop.f32.mrb[0].mxu0
        %v1075 = vadd.f32 0.0, %v1074
        %v1076 = vpop.f32.mrb[0].mxu0
        %v1077 = vpop.f32.mrb[0].mxu0
        %1078 = vdwg.mxu0
        %1079 = vmatprep.subr.bf16.mxu0 %v970
        %1080 = vmatpush1.bf16.msra.mxu0 %v969
        %1081 = vmatprep.subr.bf16.mxu0 %v974
        %1082 = vmatpush1.bf16.msra.mxu0 %v973
        %1083 = vmatprep.subr.bf16.mxu0 %v978
        %1084 = vmatpush1.bf16.msra.mxu0 %v977
        %1085 = vmatprep.subr.bf16.mxu0 %v982
        %1086 = vmatpush1.bf16.msra.mxu0 %v981
        %1087 = vmatprep.subr.bf16.mxu0 %v986
        %1088 = vmatpush1.bf16.msra.mxu0 %v985
        %1089 = vmatprep.subr.bf16.mxu0 %v990
        %1090 = vmatpush1.bf16.msra.mxu0 %v989
        %1091 = vmatprep.subr.bf16.mxu0 %v994
        %1092 = vmatpush1.bf16.msra.mxu0 %v993
        %1093 = vmatprep.subr.bf16.mxu0 %v998
        %1094 = vmatpush1.bf16.msra.mxu0 %v997
        %1095 = vmatprep.subr.bf16.mxu0 %v1002
        %1096 = vmatpush1.bf16.msra.mxu0 %v1001
        %1097 = vmatprep.subr.bf16.mxu0 %v1006
        %1098 = vmatpush1.bf16.msra.mxu0 %v1005
        %1099 = vmatprep.subr.bf16.mxu0 %v1010
        %1100 = vmatpush1.bf16.msra.mxu0 %v1009
        %1101 = vmatprep.subr.bf16.mxu0 %v1014
        %1102 = vmatpush1.bf16.msra.mxu0 %v1013
        %1103 = vmatprep.subr.bf16.mxu0 %v1018
        %1104 = vmatpush1.bf16.msra.mxu0 %v1017
        %1105 = vmatprep.subr.bf16.mxu0 %v1022
        %1106 = vmatpush1.bf16.msra.mxu0 %v1021
        %1107 = vmatprep.subr.bf16.mxu0 %v1026
        %1108 = vmatpush1.bf16.msra.mxu0 %v1025
        %1109 = vmatprep.subr.bf16.mxu0 %v1030
        %1110 = vmatpush1.bf16.msra.mxu0 %v1029
        %1111 = vmatprep.mubr.bf16.mxu0 %v1035
        %1112 = vmatmul.mubr.bf16.gmra.mrb[0].mxu0 %v1034
        %v1113 = vpop.f32.mrb[0].mxu0
        %v1114 = vadd.f32 0.0, %v1113
        %v1115 = vpop.f32.mrb[0].mxu0
        %v1116 = vadd.f32 0.0, %v1115
        %v1117 = vpop.f32.mrb[0].mxu0
        %v1118 = vpop.f32.mrb[0].mxu0
        %1119 = vdwg.mxu0
        %v1124 = vrot.slane %v1073, 1
        %v1125 = vrot.slane %v1075, 1
        %v1126 = vrot.slane %v1114, 1
        %v1127 = vrot.slane %v1116, 1
        %v1132 = vadd.f32 %v1073, %v1124
        %v1133 = vadd.f32 %v1075, %v1125
        %v1134 = vadd.f32 %v1114, %v1126
        %v1135 = vadd.f32 %v1116, %v1127
        %v1136 = vrot.slane %v1073, 2
        %v1137 = vrot.slane %v1075, 2
        %v1138 = vrot.slane %v1114, 2
        %v1139 = vrot.slane %v1116, 2
        %v1144 = vadd.f32 %v1132, %v1136
        %v1145 = vadd.f32 %v1133, %v1137
        %v1146 = vadd.f32 %v1134, %v1138
        %v1147 = vadd.f32 %v1135, %v1139
        %v1148 = vadd.f32 %v1144, 0.0
        %v1149 = vadd.f32 %v1145, 0.0
        %v1150 = vadd.f32 %v1146, 0.0
        %v1151 = vadd.f32 %v1147, 0.0
        %s1152 = smul.u32 1, 4
        %s1153 = smul.addr %s1152, 8
        %s1154 = scalar_lea.vmem %s334, %s1153 [#allocation7]
        %v1155 = vld [vmem:[%s1154] sm:$0xff]
        %v1156 = vld [vmem:[%s1154 + $0x8] sm:$0xff]
        %v1157 = vld [vmem:[%s1154 + $0x10] sm:$0xff]
        %v1158 = vld [vmem:[%s1154 + $0x18] sm:$0xff]
        %s1159 = sadd.s32 %s1152, 8
        %s1160 = smul.addr %s1159, 8
        %s1161 = scalar_lea.vmem %s334, %s1160 [#allocation7]
        %v1162 = vld [vmem:[%s1161] sm:$0xff]
        %v1163 = vld [vmem:[%s1161 + $0x8] sm:$0xff]
        %v1164 = vld [vmem:[%s1161 + $0x10] sm:$0xff]
        %v1165 = vld [vmem:[%s1161 + $0x18] sm:$0xff]
        %s1166 = sadd.s32 %s1152, 16
        %s1167 = smul.addr %s1166, 8
        %s1168 = scalar_lea.vmem %s334, %s1167 [#allocation7]
        %v1169 = vld [vmem:[%s1168] sm:$0xff]
        %v1170 = vld [vmem:[%s1168 + $0x8] sm:$0xff]
        %v1171 = vld [vmem:[%s1168 + $0x10] sm:$0xff]
        %v1172 = vld [vmem:[%s1168 + $0x18] sm:$0xff]
        %v1173 = vand.u32 %v1155, 7
        %v1174 = vand.u32 %v1156, 7
        %v1175 = vand.u32 %v1157, 7
        %v1176 = vand.u32 %v1158, 7
        %v1177 = vshra.s32 %v1155, 3
        %v1178 = vshra.s32 %v1156, 3
        %v1179 = vshra.s32 %v1157, 3
        %v1180 = vshra.s32 %v1158, 3
        %v1181 = vand.u32 %v1177, 7
        %v1182 = vand.u32 %v1178, 7
        %v1183 = vand.u32 %v1179, 7
        %v1184 = vand.u32 %v1180, 7
        %v1185 = vcvt.s32.f32 %v1173
        %v1186 = vcvt.s32.f32 %v1174
        %v1187 = vcvt.s32.f32 %v1175
        %v1188 = vcvt.s32.f32 %v1176
        %v1189 = vcvt.s32.f32 %v1181
        %v1190 = vcvt.s32.f32 %v1182
        %v1191 = vcvt.s32.f32 %v1183
        %v1192 = vcvt.s32.f32 %v1184
        %v1193 = vpack.c.bf16 %v1189, %v1185
        %v1194 = vpack.c.bf16 %v1190, %v1186
        %v1195 = vpack.c.bf16 %v1191, %v1187
        %v1196 = vpack.c.bf16 %v1192, %v1188
        %1197 = vst [vmem:[#allocation2] sm:$0xff] %v1193
        %1198 = vst [vmem:[#allocation2 + $0x8] sm:$0xff] %v1194
        %1199 = vst [vmem:[#allocation2 + $0x10] sm:$0xff] %v1195
        %1200 = vst [vmem:[#allocation2 + $0x18] sm:$0xff] %v1196
        %v1201 = vshra.s32 %v1155, 6
        %v1202 = vshra.s32 %v1156, 6
        %v1203 = vshra.s32 %v1157, 6
        %v1204 = vshra.s32 %v1158, 6
        %v1205 = vand.u32 %v1201, 7
        %v1206 = vand.u32 %v1202, 7
        %v1207 = vand.u32 %v1203, 7
        %v1208 = vand.u32 %v1204, 7
        %v1209 = vshra.s32 %v1155, 9
        %v1210 = vshra.s32 %v1156, 9
        %v1211 = vshra.s32 %v1157, 9
        %v1212 = vshra.s32 %v1158, 9
        %v1213 = vand.u32 %v1209, 7
        %v1214 = vand.u32 %v1210, 7
        %v1215 = vand.u32 %v1211, 7
        %v1216 = vand.u32 %v1212, 7
        %v1217 = vcvt.s32.f32 %v1205
        %v1218 = vcvt.s32.f32 %v1206
        %v1219 = vcvt.s32.f32 %v1207
        %v1220 = vcvt.s32.f32 %v1208
        %v1221 = vcvt.s32.f32 %v1213
        %v1222 = vcvt.s32.f32 %v1214
        %v1223 = vcvt.s32.f32 %v1215
        %v1224 = vcvt.s32.f32 %v1216
        %v1225 = vpack.c.bf16 %v1221, %v1217
        %v1226 = vpack.c.bf16 %v1222, %v1218
        %v1227 = vpack.c.bf16 %v1223, %v1219
        %v1228 = vpack.c.bf16 %v1224, %v1220
        %1229 = vst [vmem:[#allocation2 + $0x20] sm:$0xff] %v1225
        %1230 = vst [vmem:[#allocation2 + $0x28] sm:$0xff] %v1226
        %1231 = vst [vmem:[#allocation2 + $0x30] sm:$0xff] %v1227
        %1232 = vst [vmem:[#allocation2 + $0x38] sm:$0xff] %v1228
        %v1233 = vshra.s32 %v1155, 12
        %v1234 = vshra.s32 %v1156, 12
        %v1235 = vshra.s32 %v1157, 12
        %v1236 = vshra.s32 %v1158, 12
        %v1237 = vand.u32 %v1233, 7
        %v1238 = vand.u32 %v1234, 7
        %v1239 = vand.u32 %v1235, 7
        %v1240 = vand.u32 %v1236, 7
        %v1241 = vshra.s32 %v1155, 15
        %v1242 = vshra.s32 %v1156, 15
        %v1243 = vshra.s32 %v1157, 15
        %v1244 = vshra.s32 %v1158, 15
        %v1245 = vand.u32 %v1241, 7
        %v1246 = vand.u32 %v1242, 7
        %v1247 = vand.u32 %v1243, 7
        %v1248 = vand.u32 %v1244, 7
        %v1249 = vcvt.s32.f32 %v1237
        %v1250 = vcvt.s32.f32 %v1238
        %v1251 = vcvt.s32.f32 %v1239
        %v1252 = vcvt.s32.f32 %v1240
        %v1253 = vcvt.s32.f32 %v1245
        %v1254 = vcvt.s32.f32 %v1246
        %v1255 = vcvt.s32.f32 %v1247
        %v1256 = vcvt.s32.f32 %v1248
        %v1257 = vpack.c.bf16 %v1253, %v1249
        %v1258 = vpack.c.bf16 %v1254, %v1250
        %v1259 = vpack.c.bf16 %v1255, %v1251
        %v1260 = vpack.c.bf16 %v1256, %v1252
        %1261 = vst [vmem:[#allocation2 + $0x40] sm:$0xff] %v1257
        %1262 = vst [vmem:[#allocation2 + $0x48] sm:$0xff] %v1258
        %1263 = vst [vmem:[#allocation2 + $0x50] sm:$0xff] %v1259
        %1264 = vst [vmem:[#allocation2 + $0x58] sm:$0xff] %v1260
        %v1265 = vshra.s32 %v1155, 18
        %v1266 = vshra.s32 %v1156, 18
        %v1267 = vshra.s32 %v1157, 18
        %v1268 = vshra.s32 %v1158, 18
        %v1269 = vand.u32 %v1265, 7
        %v1270 = vand.u32 %v1266, 7
        %v1271 = vand.u32 %v1267, 7
        %v1272 = vand.u32 %v1268, 7
        %v1273 = vshra.s32 %v1155, 21
        %v1274 = vshra.s32 %v1156, 21
        %v1275 = vshra.s32 %v1157, 21
        %v1276 = vshra.s32 %v1158, 21
        %v1277 = vand.u32 %v1273, 7
        %v1278 = vand.u32 %v1274, 7
        %v1279 = vand.u32 %v1275, 7
        %v1280 = vand.u32 %v1276, 7
        %v1281 = vcvt.s32.f32 %v1269
        %v1282 = vcvt.s32.f32 %v1270
        %v1283 = vcvt.s32.f32 %v1271
        %v1284 = vcvt.s32.f32 %v1272
        %v1285 = vcvt.s32.f32 %v1277
        %v1286 = vcvt.s32.f32 %v1278
        %v1287 = vcvt.s32.f32 %v1279
        %v1288 = vcvt.s32.f32 %v1280
        %v1289 = vpack.c.bf16 %v1285, %v1281
        %v1290 = vpack.c.bf16 %v1286, %v1282
        %v1291 = vpack.c.bf16 %v1287, %v1283
        %v1292 = vpack.c.bf16 %v1288, %v1284
        %1293 = vst [vmem:[#allocation2 + $0x60] sm:$0xff] %v1289
        %1294 = vst [vmem:[#allocation2 + $0x68] sm:$0xff] %v1290
        %1295 = vst [vmem:[#allocation2 + $0x70] sm:$0xff] %v1291
        %1296 = vst [vmem:[#allocation2 + $0x78] sm:$0xff] %v1292
        %v1297 = vshra.s32 %v1155, 24
        %v1298 = vshra.s32 %v1156, 24
        %v1299 = vshra.s32 %v1157, 24
        %v1300 = vshra.s32 %v1158, 24
        %v1301 = vand.u32 %v1297, 7
        %v1302 = vand.u32 %v1298, 7
        %v1303 = vand.u32 %v1299, 7
        %v1304 = vand.u32 %v1300, 7
        %v1305 = vshra.s32 %v1155, 27
        %v1306 = vshra.s32 %v1156, 27
        %v1307 = vshra.s32 %v1157, 27
        %v1308 = vshra.s32 %v1158, 27
        %v1309 = vand.u32 %v1305, 7
        %v1310 = vand.u32 %v1306, 7
        %v1311 = vand.u32 %v1307, 7
        %v1312 = vand.u32 %v1308, 7
        %v1313 = vcvt.s32.f32 %v1301
        %v1314 = vcvt.s32.f32 %v1302
        %v1315 = vcvt.s32.f32 %v1303
        %v1316 = vcvt.s32.f32 %v1304
        %v1317 = vcvt.s32.f32 %v1309
        %v1318 = vcvt.s32.f32 %v1310
        %v1319 = vcvt.s32.f32 %v1311
        %v1320 = vcvt.s32.f32 %v1312
        %v1321 = vpack.c.bf16 %v1317, %v1313
        %v1322 = vpack.c.bf16 %v1318, %v1314
        %v1323 = vpack.c.bf16 %v1319, %v1315
        %v1324 = vpack.c.bf16 %v1320, %v1316
        %1325 = vst [vmem:[#allocation2 + $0x80] sm:$0xff] %v1321
        %1326 = vst [vmem:[#allocation2 + $0x88] sm:$0xff] %v1322
        %1327 = vst [vmem:[#allocation2 + $0x90] sm:$0xff] %v1323
        %1328 = vst [vmem:[#allocation2 + $0x98] sm:$0xff] %v1324
        %v1329 = vshra.s32 %v1155, 30
        %v1330 = vshra.s32 %v1156, 30
        %v1331 = vshra.s32 %v1157, 30
        %v1332 = vshra.s32 %v1158, 30
        %v1333 = vand.u32 %v1329, 3
        %v1334 = vand.u32 %v1330, 3
        %v1335 = vand.u32 %v1331, 3
        %v1336 = vand.u32 %v1332, 3
        %v1337 = vand.u32 %v1162, 1
        %v1338 = vand.u32 %v1163, 1
        %v1339 = vand.u32 %v1164, 1
        %v1340 = vand.u32 %v1165, 1
        %v1341 = vshll.u32 %v1337, 2
        %v1342 = vshll.u32 %v1338, 2
        %v1343 = vshll.u32 %v1339, 2
        %v1344 = vshll.u32 %v1340, 2
        %v1345 = vor.u32 %v1333, %v1341
        %v1346 = vor.u32 %v1334, %v1342
        %v1347 = vor.u32 %v1335, %v1343
        %v1348 = vor.u32 %v1336, %v1344
        %v1349 = vshra.s32 %v1162, 1
        %v1350 = vshra.s32 %v1163, 1
        %v1351 = vshra.s32 %v1164, 1
        %v1352 = vshra.s32 %v1165, 1
        %v1353 = vand.u32 %v1349, 7
        %v1354 = vand.u32 %v1350, 7
        %v1355 = vand.u32 %v1351, 7
        %v1356 = vand.u32 %v1352, 7
        %v1357 = vcvt.s32.f32 %v1345
        %v1358 = vcvt.s32.f32 %v1346
        %v1359 = vcvt.s32.f32 %v1347
        %v1360 = vcvt.s32.f32 %v1348
        %v1361 = vcvt.s32.f32 %v1353
        %v1362 = vcvt.s32.f32 %v1354
        %v1363 = vcvt.s32.f32 %v1355
        %v1364 = vcvt.s32.f32 %v1356
        %v1365 = vpack.c.bf16 %v1361, %v1357
        %v1366 = vpack.c.bf16 %v1362, %v1358
        %v1367 = vpack.c.bf16 %v1363, %v1359
        %v1368 = vpack.c.bf16 %v1364, %v1360
        %1369 = vst [vmem:[#allocation2 + $0xa0] sm:$0xff] %v1365
        %1370 = vst [vmem:[#allocation2 + $0xa8] sm:$0xff] %v1366
        %1371 = vst [vmem:[#allocation2 + $0xb0] sm:$0xff] %v1367
        %1372 = vst [vmem:[#allocation2 + $0xb8] sm:$0xff] %v1368
        %v1373 = vshra.s32 %v1162, 4
        %v1374 = vshra.s32 %v1163, 4
        %v1375 = vshra.s32 %v1164, 4
        %v1376 = vshra.s32 %v1165, 4
        %v1377 = vand.u32 %v1373, 7
        %v1378 = vand.u32 %v1374, 7
        %v1379 = vand.u32 %v1375, 7
        %v1380 = vand.u32 %v1376, 7
        %v1381 = vshra.s32 %v1162, 7
        %v1382 = vshra.s32 %v1163, 7
        %v1383 = vshra.s32 %v1164, 7
        %v1384 = vshra.s32 %v1165, 7
        %v1385 = vand.u32 %v1381, 7
        %v1386 = vand.u32 %v1382, 7
        %v1387 = vand.u32 %v1383, 7
        %v1388 = vand.u32 %v1384, 7
        %v1389 = vcvt.s32.f32 %v1377
        %v1390 = vcvt.s32.f32 %v1378
        %v1391 = vcvt.s32.f32 %v1379
        %v1392 = vcvt.s32.f32 %v1380
        %v1393 = vcvt.s32.f32 %v1385
        %v1394 = vcvt.s32.f32 %v1386
        %v1395 = vcvt.s32.f32 %v1387
        %v1396 = vcvt.s32.f32 %v1388
        %v1397 = vpack.c.bf16 %v1393, %v1389
        %v1398 = vpack.c.bf16 %v1394, %v1390
        %v1399 = vpack.c.bf16 %v1395, %v1391
        %v1400 = vpack.c.bf16 %v1396, %v1392
        %1401 = vst [vmem:[#allocation2 + $0xc0] sm:$0xff] %v1397
        %1402 = vst [vmem:[#allocation2 + $0xc8] sm:$0xff] %v1398
        %1403 = vst [vmem:[#allocation2 + $0xd0] sm:$0xff] %v1399
        %1404 = vst [vmem:[#allocation2 + $0xd8] sm:$0xff] %v1400
        %v1405 = vshra.s32 %v1162, 10
        %v1406 = vshra.s32 %v1163, 10
        %v1407 = vshra.s32 %v1164, 10
        %v1408 = vshra.s32 %v1165, 10
        %v1409 = vand.u32 %v1405, 7
        %v1410 = vand.u32 %v1406, 7
        %v1411 = vand.u32 %v1407, 7
        %v1412 = vand.u32 %v1408, 7
        %v1413 = vshra.s32 %v1162, 13
        %v1414 = vshra.s32 %v1163, 13
        %v1415 = vshra.s32 %v1164, 13
        %v1416 = vshra.s32 %v1165, 13
        %v1417 = vand.u32 %v1413, 7
        %v1418 = vand.u32 %v1414, 7
        %v1419 = vand.u32 %v1415, 7
        %v1420 = vand.u32 %v1416, 7
        %v1421 = vcvt.s32.f32 %v1409
        %v1422 = vcvt.s32.f32 %v1410
        %v1423 = vcvt.s32.f32 %v1411
        %v1424 = vcvt.s32.f32 %v1412
        %v1425 = vcvt.s32.f32 %v1417
        %v1426 = vcvt.s32.f32 %v1418
        %v1427 = vcvt.s32.f32 %v1419
        %v1428 = vcvt.s32.f32 %v1420
        %v1429 = vpack.c.bf16 %v1425, %v1421
        %v1430 = vpack.c.bf16 %v1426, %v1422
        %v1431 = vpack.c.bf16 %v1427, %v1423
        %v1432 = vpack.c.bf16 %v1428, %v1424
        %1433 = vst [vmem:[#allocation2 + $0xe0] sm:$0xff] %v1429
        %1434 = vst [vmem:[#allocation2 + $0xe8] sm:$0xff] %v1430
        %1435 = vst [vmem:[#allocation2 + $0xf0] sm:$0xff] %v1431
        %1436 = vst [vmem:[#allocation2 + $0xf8] sm:$0xff] %v1432
        %v1437 = vshra.s32 %v1162, 16
        %v1438 = vshra.s32 %v1163, 16
        %v1439 = vshra.s32 %v1164, 16
        %v1440 = vshra.s32 %v1165, 16
        %v1441 = vand.u32 %v1437, 7
        %v1442 = vand.u32 %v1438, 7
        %v1443 = vand.u32 %v1439, 7
        %v1444 = vand.u32 %v1440, 7
        %v1445 = vshra.s32 %v1162, 19
        %v1446 = vshra.s32 %v1163, 19
        %v1447 = vshra.s32 %v1164, 19
        %v1448 = vshra.s32 %v1165, 19
        %v1449 = vand.u32 %v1445, 7
        %v1450 = vand.u32 %v1446, 7
        %v1451 = vand.u32 %v1447, 7
        %v1452 = vand.u32 %v1448, 7
        %v1453 = vcvt.s32.f32 %v1441
        %v1454 = vcvt.s32.f32 %v1442
        %v1455 = vcvt.s32.f32 %v1443
        %v1456 = vcvt.s32.f32 %v1444
        %v1457 = vcvt.s32.f32 %v1449
        %v1458 = vcvt.s32.f32 %v1450
        %v1459 = vcvt.s32.f32 %v1451
        %v1460 = vcvt.s32.f32 %v1452
        %v1461 = vpack.c.bf16 %v1457, %v1453
        %v1462 = vpack.c.bf16 %v1458, %v1454
        %v1463 = vpack.c.bf16 %v1459, %v1455
        %v1464 = vpack.c.bf16 %v1460, %v1456
        %1465 = vst [vmem:[#allocation2 + $0x100] sm:$0xff] %v1461
        %1466 = vst [vmem:[#allocation2 + $0x108] sm:$0xff] %v1462
        %1467 = vst [vmem:[#allocation2 + $0x110] sm:$0xff] %v1463
        %1468 = vst [vmem:[#allocation2 + $0x118] sm:$0xff] %v1464
        %v1469 = vshra.s32 %v1162, 22
        %v1470 = vshra.s32 %v1163, 22
        %v1471 = vshra.s32 %v1164, 22
        %v1472 = vshra.s32 %v1165, 22
        %v1473 = vand.u32 %v1469, 7
        %v1474 = vand.u32 %v1470, 7
        %v1475 = vand.u32 %v1471, 7
        %v1476 = vand.u32 %v1472, 7
        %v1477 = vshra.s32 %v1162, 25
        %v1478 = vshra.s32 %v1163, 25
        %v1479 = vshra.s32 %v1164, 25
        %v1480 = vshra.s32 %v1165, 25
        %v1481 = vand.u32 %v1477, 7
        %v1482 = vand.u32 %v1478, 7
        %v1483 = vand.u32 %v1479, 7
        %v1484 = vand.u32 %v1480, 7
        %v1485 = vcvt.s32.f32 %v1473
        %v1486 = vcvt.s32.f32 %v1474
        %v1487 = vcvt.s32.f32 %v1475
        %v1488 = vcvt.s32.f32 %v1476
        %v1489 = vcvt.s32.f32 %v1481
        %v1490 = vcvt.s32.f32 %v1482
        %v1491 = vcvt.s32.f32 %v1483
        %v1492 = vcvt.s32.f32 %v1484
        %v1493 = vpack.c.bf16 %v1489, %v1485
        %v1494 = vpack.c.bf16 %v1490, %v1486
        %v1495 = vpack.c.bf16 %v1491, %v1487
        %v1496 = vpack.c.bf16 %v1492, %v1488
        %1497 = vst [vmem:[#allocation2 + $0x120] sm:$0xff] %v1493
        %1498 = vst [vmem:[#allocation2 + $0x128] sm:$0xff] %v1494
        %1499 = vst [vmem:[#allocation2 + $0x130] sm:$0xff] %v1495
        %1500 = vst [vmem:[#allocation2 + $0x138] sm:$0xff] %v1496
        %v1501 = vshra.s32 %v1162, 28
        %v1502 = vshra.s32 %v1163, 28
        %v1503 = vshra.s32 %v1164, 28
        %v1504 = vshra.s32 %v1165, 28
        %v1505 = vand.u32 %v1501, 7
        %v1506 = vand.u32 %v1502, 7
        %v1507 = vand.u32 %v1503, 7
        %v1508 = vand.u32 %v1504, 7
        %v1509 = vshra.s32 %v1162, 31
        %v1510 = vshra.s32 %v1163, 31
        %v1511 = vshra.s32 %v1164, 31
        %v1512 = vshra.s32 %v1165, 31
        %v1513 = vand.u32 %v1509, 1
        %v1514 = vand.u32 %v1510, 1
        %v1515 = vand.u32 %v1511, 1
        %v1516 = vand.u32 %v1512, 1
        %v1517 = vand.u32 %v1169, 3
        %v1518 = vand.u32 %v1170, 3
        %v1519 = vand.u32 %v1171, 3
        %v1520 = vand.u32 %v1172, 3
        %v1521 = vshll.u32 %v1517, 1
        %v1522 = vshll.u32 %v1518, 1
        %v1523 = vshll.u32 %v1519, 1
        %v1524 = vshll.u32 %v1520, 1
        %v1525 = vor.u32 %v1513, %v1521
        %v1526 = vor.u32 %v1514, %v1522
        %v1527 = vor.u32 %v1515, %v1523
        %v1528 = vor.u32 %v1516, %v1524
        %v1529 = vcvt.s32.f32 %v1505
        %v1530 = vcvt.s32.f32 %v1506
        %v1531 = vcvt.s32.f32 %v1507
        %v1532 = vcvt.s32.f32 %v1508
        %v1533 = vcvt.s32.f32 %v1525
        %v1534 = vcvt.s32.f32 %v1526
        %v1535 = vcvt.s32.f32 %v1527
        %v1536 = vcvt.s32.f32 %v1528
        %v1537 = vpack.c.bf16 %v1533, %v1529
        %v1538 = vpack.c.bf16 %v1534, %v1530
        %v1539 = vpack.c.bf16 %v1535, %v1531
        %v1540 = vpack.c.bf16 %v1536, %v1532
        %1541 = vst [vmem:[#allocation2 + $0x140] sm:$0xff] %v1537
        %1542 = vst [vmem:[#allocation2 + $0x148] sm:$0xff] %v1538
        %1543 = vst [vmem:[#allocation2 + $0x150] sm:$0xff] %v1539
        %1544 = vst [vmem:[#allocation2 + $0x158] sm:$0xff] %v1540
        %v1545 = vshra.s32 %v1169, 2
        %v1546 = vshra.s32 %v1170, 2
        %v1547 = vshra.s32 %v1171, 2
        %v1548 = vshra.s32 %v1172, 2
        %v1549 = vand.u32 %v1545, 7
        %v1550 = vand.u32 %v1546, 7
        %v1551 = vand.u32 %v1547, 7
        %v1552 = vand.u32 %v1548, 7
        %v1553 = vshra.s32 %v1169, 5
        %v1554 = vshra.s32 %v1170, 5
        %v1555 = vshra.s32 %v1171, 5
        %v1556 = vshra.s32 %v1172, 5
        %v1557 = vand.u32 %v1553, 7
        %v1558 = vand.u32 %v1554, 7
        %v1559 = vand.u32 %v1555, 7
        %v1560 = vand.u32 %v1556, 7
        %v1561 = vcvt.s32.f32 %v1549
        %v1562 = vcvt.s32.f32 %v1550
        %v1563 = vcvt.s32.f32 %v1551
        %v1564 = vcvt.s32.f32 %v1552
        %v1565 = vcvt.s32.f32 %v1557
        %v1566 = vcvt.s32.f32 %v1558
        %v1567 = vcvt.s32.f32 %v1559
        %v1568 = vcvt.s32.f32 %v1560
        %v1569 = vpack.c.bf16 %v1565, %v1561
        %v1570 = vpack.c.bf16 %v1566, %v1562
        %v1571 = vpack.c.bf16 %v1567, %v1563
        %v1572 = vpack.c.bf16 %v1568, %v1564
        %1573 = vst [vmem:[#allocation2 + $0x160] sm:$0xff] %v1569
        %1574 = vst [vmem:[#allocation2 + $0x168] sm:$0xff] %v1570
        %1575 = vst [vmem:[#allocation2 + $0x170] sm:$0xff] %v1571
        %1576 = vst [vmem:[#allocation2 + $0x178] sm:$0xff] %v1572
        %v1577 = vshra.s32 %v1169, 8
        %v1578 = vshra.s32 %v1170, 8
        %v1579 = vshra.s32 %v1171, 8
        %v1580 = vshra.s32 %v1172, 8
        %v1581 = vand.u32 %v1577, 7
        %v1582 = vand.u32 %v1578, 7
        %v1583 = vand.u32 %v1579, 7
        %v1584 = vand.u32 %v1580, 7
        %v1585 = vshra.s32 %v1169, 11
        %v1586 = vshra.s32 %v1170, 11
        %v1587 = vshra.s32 %v1171, 11
        %v1588 = vshra.s32 %v1172, 11
        %v1589 = vand.u32 %v1585, 7
        %v1590 = vand.u32 %v1586, 7
        %v1591 = vand.u32 %v1587, 7
        %v1592 = vand.u32 %v1588, 7
        %v1593 = vcvt.s32.f32 %v1581
        %v1594 = vcvt.s32.f32 %v1582
        %v1595 = vcvt.s32.f32 %v1583
        %v1596 = vcvt.s32.f32 %v1584
        %v1597 = vcvt.s32.f32 %v1589
        %v1598 = vcvt.s32.f32 %v1590
        %v1599 = vcvt.s32.f32 %v1591
        %v1600 = vcvt.s32.f32 %v1592
        %v1601 = vpack.c.bf16 %v1597, %v1593
        %v1602 = vpack.c.bf16 %v1598, %v1594
        %v1603 = vpack.c.bf16 %v1599, %v1595
        %v1604 = vpack.c.bf16 %v1600, %v1596
        %1605 = vst [vmem:[#allocation2 + $0x180] sm:$0xff] %v1601
        %1606 = vst [vmem:[#allocation2 + $0x188] sm:$0xff] %v1602
        %1607 = vst [vmem:[#allocation2 + $0x190] sm:$0xff] %v1603
        %1608 = vst [vmem:[#allocation2 + $0x198] sm:$0xff] %v1604
        %v1609 = vshra.s32 %v1169, 14
        %v1610 = vshra.s32 %v1170, 14
        %v1611 = vshra.s32 %v1171, 14
        %v1612 = vshra.s32 %v1172, 14
        %v1613 = vand.u32 %v1609, 7
        %v1614 = vand.u32 %v1610, 7
        %v1615 = vand.u32 %v1611, 7
        %v1616 = vand.u32 %v1612, 7
        %v1617 = vshra.s32 %v1169, 17
        %v1618 = vshra.s32 %v1170, 17
        %v1619 = vshra.s32 %v1171, 17
        %v1620 = vshra.s32 %v1172, 17
        %v1621 = vand.u32 %v1617, 7
        %v1622 = vand.u32 %v1618, 7
        %v1623 = vand.u32 %v1619, 7
        %v1624 = vand.u32 %v1620, 7
        %v1625 = vcvt.s32.f32 %v1613
        %v1626 = vcvt.s32.f32 %v1614
        %v1627 = vcvt.s32.f32 %v1615
        %v1628 = vcvt.s32.f32 %v1616
        %v1629 = vcvt.s32.f32 %v1621
        %v1630 = vcvt.s32.f32 %v1622
        %v1631 = vcvt.s32.f32 %v1623
        %v1632 = vcvt.s32.f32 %v1624
        %v1633 = vpack.c.bf16 %v1629, %v1625
        %v1634 = vpack.c.bf16 %v1630, %v1626
        %v1635 = vpack.c.bf16 %v1631, %v1627
        %v1636 = vpack.c.bf16 %v1632, %v1628
        %1637 = vst [vmem:[#allocation2 + $0x1a0] sm:$0xff] %v1633
        %1638 = vst [vmem:[#allocation2 + $0x1a8] sm:$0xff] %v1634
        %1639 = vst [vmem:[#allocation2 + $0x1b0] sm:$0xff] %v1635
        %1640 = vst [vmem:[#allocation2 + $0x1b8] sm:$0xff] %v1636
        %v1641 = vshra.s32 %v1169, 20
        %v1642 = vshra.s32 %v1170, 20
        %v1643 = vshra.s32 %v1171, 20
        %v1644 = vshra.s32 %v1172, 20
        %v1645 = vand.u32 %v1641, 7
        %v1646 = vand.u32 %v1642, 7
        %v1647 = vand.u32 %v1643, 7
        %v1648 = vand.u32 %v1644, 7
        %v1649 = vshra.s32 %v1169, 23
        %v1650 = vshra.s32 %v1170, 23
        %v1651 = vshra.s32 %v1171, 23
        %v1652 = vshra.s32 %v1172, 23
        %v1653 = vand.u32 %v1649, 7
        %v1654 = vand.u32 %v1650, 7
        %v1655 = vand.u32 %v1651, 7
        %v1656 = vand.u32 %v1652, 7
        %v1657 = vcvt.s32.f32 %v1645
        %v1658 = vcvt.s32.f32 %v1646
        %v1659 = vcvt.s32.f32 %v1647
        %v1660 = vcvt.s32.f32 %v1648
        %v1661 = vcvt.s32.f32 %v1653
        %v1662 = vcvt.s32.f32 %v1654
        %v1663 = vcvt.s32.f32 %v1655
        %v1664 = vcvt.s32.f32 %v1656
        %v1665 = vpack.c.bf16 %v1661, %v1657
        %v1666 = vpack.c.bf16 %v1662, %v1658
        %v1667 = vpack.c.bf16 %v1663, %v1659
        %v1668 = vpack.c.bf16 %v1664, %v1660
        %1669 = vst [vmem:[#allocation2 + $0x1c0] sm:$0xff] %v1665
        %1670 = vst [vmem:[#allocation2 + $0x1c8] sm:$0xff] %v1666
        %1671 = vst [vmem:[#allocation2 + $0x1d0] sm:$0xff] %v1667
        %1672 = vst [vmem:[#allocation2 + $0x1d8] sm:$0xff] %v1668
        %v1673 = vshra.s32 %v1169, 26
        %v1674 = vshra.s32 %v1170, 26
        %v1675 = vshra.s32 %v1171, 26
        %v1676 = vshra.s32 %v1172, 26
        %v1677 = vand.u32 %v1673, 7
        %v1678 = vand.u32 %v1674, 7
        %v1679 = vand.u32 %v1675, 7
        %v1680 = vand.u32 %v1676, 7
        %v1681 = vshra.s32 %v1169, 29
        %v1682 = vshra.s32 %v1170, 29
        %v1683 = vshra.s32 %v1171, 29
        %v1684 = vshra.s32 %v1172, 29
        %v1685 = vand.u32 %v1681, 7
        %v1686 = vand.u32 %v1682, 7
        %v1687 = vand.u32 %v1683, 7
        %v1688 = vand.u32 %v1684, 7
        %v1689 = vcvt.s32.f32 %v1677
        %v1690 = vcvt.s32.f32 %v1678
        %v1691 = vcvt.s32.f32 %v1679
        %v1692 = vcvt.s32.f32 %v1680
        %v1693 = vcvt.s32.f32 %v1685
        %v1694 = vcvt.s32.f32 %v1686
        %v1695 = vcvt.s32.f32 %v1687
        %v1696 = vcvt.s32.f32 %v1688
        %v1697 = vpack.c.bf16 %v1693, %v1689
        %v1698 = vpack.c.bf16 %v1694, %v1690
        %v1699 = vpack.c.bf16 %v1695, %v1691
        %v1700 = vpack.c.bf16 %v1696, %v1692
        %1701 = vst [vmem:[#allocation2 + $0x1e0] sm:$0xff] %v1697
        %1702 = vst [vmem:[#allocation2 + $0x1e8] sm:$0xff] %v1698
        %1703 = vst [vmem:[#allocation2 + $0x1f0] sm:$0xff] %v1699
        %1704 = vst [vmem:[#allocation2 + $0x1f8] sm:$0xff] %v1700
        %s1705 = scalar_lea.vmem [#allocation4], 8
        %v1706 = vld [vmem:[%s1705] sm:$0xff]
        %v1707 = vld [vmem:[#allocation2] sm:$0xff]
        %v1708 = vld [vmem:[#allocation2 + $0x8] sm:$0xff]
        %v1709 = vld [vmem:[#allocation2 + $0x10] sm:$0xff]
        %v1710 = vld [vmem:[#allocation2 + $0x18] sm:$0xff]
        %v1711 = vld [vmem:[#allocation2 + $0x20] sm:$0xff]
        %v1712 = vld [vmem:[#allocation2 + $0x28] sm:$0xff]
        %v1713 = vld [vmem:[#allocation2 + $0x30] sm:$0xff]
        %v1714 = vld [vmem:[#allocation2 + $0x38] sm:$0xff]
        %v1715 = vld [vmem:[#allocation2 + $0x40] sm:$0xff]
        %v1716 = vld [vmem:[#allocation2 + $0x48] sm:$0xff]
        %v1717 = vld [vmem:[#allocation2 + $0x50] sm:$0xff]
        %v1718 = vld [vmem:[#allocation2 + $0x58] sm:$0xff]
        %v1719 = vld [vmem:[#allocation2 + $0x60] sm:$0xff]
        %v1720 = vld [vmem:[#allocation2 + $0x68] sm:$0xff]
        %v1721 = vld [vmem:[#allocation2 + $0x70] sm:$0xff]
        %v1722 = vld [vmem:[#allocation2 + $0x78] sm:$0xff]
        %v1723 = vld [vmem:[#allocation2 + $0x80] sm:$0xff]
        %v1724 = vld [vmem:[#allocation2 + $0x88] sm:$0xff]
        %v1725 = vld [vmem:[#allocation2 + $0x90] sm:$0xff]
        %v1726 = vld [vmem:[#allocation2 + $0x98] sm:$0xff]
        %v1727 = vld [vmem:[#allocation2 + $0xa0] sm:$0xff]
        %v1728 = vld [vmem:[#allocation2 + $0xa8] sm:$0xff]
        %v1729 = vld [vmem:[#allocation2 + $0xb0] sm:$0xff]
        %v1730 = vld [vmem:[#allocation2 + $0xb8] sm:$0xff]
        %v1731 = vld [vmem:[#allocation2 + $0xc0] sm:$0xff]
        %v1732 = vld [vmem:[#allocation2 + $0xc8] sm:$0xff]
        %v1733 = vld [vmem:[#allocation2 + $0xd0] sm:$0xff]
        %v1734 = vld [vmem:[#allocation2 + $0xd8] sm:$0xff]
        %v1735 = vld [vmem:[#allocation2 + $0xe0] sm:$0xff]
        %v1736 = vld [vmem:[#allocation2 + $0xe8] sm:$0xff]
        %v1737 = vld [vmem:[#allocation2 + $0xf0] sm:$0xff]
        %v1738 = vld [vmem:[#allocation2 + $0xf8] sm:$0xff]
        %v1739 = vld [vmem:[#allocation2 + $0x100] sm:$0xff]
        %v1740 = vld [vmem:[#allocation2 + $0x108] sm:$0xff]
        %v1741 = vld [vmem:[#allocation2 + $0x110] sm:$0xff]
        %v1742 = vld [vmem:[#allocation2 + $0x118] sm:$0xff]
        %v1743 = vld [vmem:[#allocation2 + $0x120] sm:$0xff]
        %v1744 = vld [vmem:[#allocation2 + $0x128] sm:$0xff]
        %v1745 = vld [vmem:[#allocation2 + $0x130] sm:$0xff]
        %v1746 = vld [vmem:[#allocation2 + $0x138] sm:$0xff]
        %v1747 = vld [vmem:[#allocation2 + $0x140] sm:$0xff]
        %v1748 = vld [vmem:[#allocation2 + $0x148] sm:$0xff]
        %v1749 = vld [vmem:[#allocation2 + $0x150] sm:$0xff]
        %v1750 = vld [vmem:[#allocation2 + $0x158] sm:$0xff]
        %v1751 = vld [vmem:[#allocation2 + $0x160] sm:$0xff]
        %v1752 = vld [vmem:[#allocation2 + $0x168] sm:$0xff]
        %v1753 = vld [vmem:[#allocation2 + $0x170] sm:$0xff]
        %v1754 = vld [vmem:[#allocation2 + $0x178] sm:$0xff]
        %v1755 = vld [vmem:[#allocation2 + $0x180] sm:$0xff]
        %v1756 = vld [vmem:[#allocation2 + $0x188] sm:$0xff]
        %v1757 = vld [vmem:[#allocation2 + $0x190] sm:$0xff]
        %v1758 = vld [vmem:[#allocation2 + $0x198] sm:$0xff]
        %v1759 = vld [vmem:[#allocation2 + $0x1a0] sm:$0xff]
        %v1760 = vld [vmem:[#allocation2 + $0x1a8] sm:$0xff]
        %v1761 = vld [vmem:[#allocation2 + $0x1b0] sm:$0xff]
        %v1762 = vld [vmem:[#allocation2 + $0x1b8] sm:$0xff]
        %v1763 = vld [vmem:[#allocation2 + $0x1c0] sm:$0xff]
        %v1764 = vld [vmem:[#allocation2 + $0x1c8] sm:$0xff]
        %v1765 = vld [vmem:[#allocation2 + $0x1d0] sm:$0xff]
        %v1766 = vld [vmem:[#allocation2 + $0x1d8] sm:$0xff]
        %v1767 = vld [vmem:[#allocation2 + $0x1e0] sm:$0xff]
        %v1768 = vld [vmem:[#allocation2 + $0x1e8] sm:$0xff]
        %v1769 = vld [vmem:[#allocation2 + $0x1f0] sm:$0xff]
        %v1770 = vld [vmem:[#allocation2 + $0x1f8] sm:$0xff]
        %v1772 = vunpack.c.l.b16 %v1706
        %v1773 = vunpack.c.h.b16 %v1706
        %v1774 = vpack.c.b16 %v1772, %v1772
        %v1775 = vpack.c.b16 %v1773, %v1773
        %1778 = vmatprep.subr.bf16.mxu0 %v1708
        %1779 = vmatpush1.bf16.msra.mxu0 %v1707
        %1780 = vmatprep.subr.bf16.mxu0 %v1712
        %1781 = vmatpush1.bf16.msra.mxu0 %v1711
        %1782 = vmatprep.subr.bf16.mxu0 %v1716
        %1783 = vmatpush1.bf16.msra.mxu0 %v1715
        %1784 = vmatprep.subr.bf16.mxu0 %v1720
        %1785 = vmatpush1.bf16.msra.mxu0 %v1719
        %1786 = vmatprep.subr.bf16.mxu0 %v1724
        %1787 = vmatpush1.bf16.msra.mxu0 %v1723
        %1788 = vmatprep.subr.bf16.mxu0 %v1728
        %1789 = vmatpush1.bf16.msra.mxu0 %v1727
        %1790 = vmatprep.subr.bf16.mxu0 %v1732
        %1791 = vmatpush1.bf16.msra.mxu0 %v1731
        %1792 = vmatprep.subr.bf16.mxu0 %v1736
        %1793 = vmatpush1.bf16.msra.mxu0 %v1735
        %1794 = vmatprep.subr.bf16.mxu0 %v1740
        %1795 = vmatpush1.bf16.msra.mxu0 %v1739
        %1796 = vmatprep.subr.bf16.mxu0 %v1744
        %1797 = vmatpush1.bf16.msra.mxu0 %v1743
        %1798 = vmatprep.subr.bf16.mxu0 %v1748
        %1799 = vmatpush1.bf16.msra.mxu0 %v1747
        %1800 = vmatprep.subr.bf16.mxu0 %v1752
        %1801 = vmatpush1.bf16.msra.mxu0 %v1751
        %1802 = vmatprep.subr.bf16.mxu0 %v1756
        %1803 = vmatpush1.bf16.msra.mxu0 %v1755
        %1804 = vmatprep.subr.bf16.mxu0 %v1760
        %1805 = vmatpush1.bf16.msra.mxu0 %v1759
        %1806 = vmatprep.subr.bf16.mxu0 %v1764
        %1807 = vmatpush1.bf16.msra.mxu0 %v1763
        %1808 = vmatprep.subr.bf16.mxu0 %v1768
        %1809 = vmatpush1.bf16.msra.mxu0 %v1767
        %1810 = vmatprep.mubr.bf16.mxu0 %v1775
        %1811 = vmatmul.mubr.bf16.gmra.mrb[0].mxu0 %v1774
        %v1812 = vpop.f32.mrb[0].mxu0
        %v1813 = vadd.f32 0.0, %v1812
        %v1814 = vpop.f32.mrb[0].mxu0
        %v1815 = vadd.f32 0.0, %v1814
        %v1816 = vpop.f32.mrb[0].mxu0
        %v1817 = vpop.f32.mrb[0].mxu0
        %1818 = vdwg.mxu0
        %1819 = vmatprep.subr.bf16.mxu0 %v1710
        %1820 = vmatpush1.bf16.msra.mxu0 %v1709
        %1821 = vmatprep.subr.bf16.mxu0 %v1714
        %1822 = vmatpush1.bf16.msra.mxu0 %v1713
        %1823 = vmatprep.subr.bf16.mxu0 %v1718
        %1824 = vmatpush1.bf16.msra.mxu0 %v1717
        %1825 = vmatprep.subr.bf16.mxu0 %v1722
        %1826 = vmatpush1.bf16.msra.mxu0 %v1721
        %1827 = vmatprep.subr.bf16.mxu0 %v1726
        %1828 = vmatpush1.bf16.msra.mxu0 %v1725
        %1829 = vmatprep.subr.bf16.mxu0 %v1730
        %1830 = vmatpush1.bf16.msra.mxu0 %v1729
        %1831 = vmatprep.subr.bf16.mxu0 %v1734
        %1832 = vmatpush1.bf16.msra.mxu0 %v1733
        %1833 = vmatprep.subr.bf16.mxu0 %v1738
        %1834 = vmatpush1.bf16.msra.mxu0 %v1737
        %1835 = vmatprep.subr.bf16.mxu0 %v1742
        %1836 = vmatpush1.bf16.msra.mxu0 %v1741
        %1837 = vmatprep.subr.bf16.mxu0 %v1746
        %1838 = vmatpush1.bf16.msra.mxu0 %v1745
        %1839 = vmatprep.subr.bf16.mxu0 %v1750
        %1840 = vmatpush1.bf16.msra.mxu0 %v1749
        %1841 = vmatprep.subr.bf16.mxu0 %v1754
        %1842 = vmatpush1.bf16.msra.mxu0 %v1753
        %1843 = vmatprep.subr.bf16.mxu0 %v1758
        %1844 = vmatpush1.bf16.msra.mxu0 %v1757
        %1845 = vmatprep.subr.bf16.mxu0 %v1762
        %1846 = vmatpush1.bf16.msra.mxu0 %v1761
        %1847 = vmatprep.subr.bf16.mxu0 %v1766
        %1848 = vmatpush1.bf16.msra.mxu0 %v1765
        %1849 = vmatprep.subr.bf16.mxu0 %v1770
        %1850 = vmatpush1.bf16.msra.mxu0 %v1769
        %1851 = vmatprep.mubr.bf16.mxu0 %v1775
        %1852 = vmatmul.mubr.bf16.gmra.mrb[0].mxu0 %v1774
        %v1853 = vpop.f32.mrb[0].mxu0
        %v1854 = vadd.f32 0.0, %v1853
        %v1855 = vpop.f32.mrb[0].mxu0
        %v1856 = vadd.f32 0.0, %v1855
        %v1857 = vpop.f32.mrb[0].mxu0
        %v1858 = vpop.f32.mrb[0].mxu0
        %1859 = vdwg.mxu0
        %v1864 = vrot.slane %v1813, 1
        %v1865 = vrot.slane %v1815, 1
        %v1866 = vrot.slane %v1854, 1
        %v1867 = vrot.slane %v1856, 1
        %v1872 = vadd.f32 %v1813, %v1864
        %v1873 = vadd.f32 %v1815, %v1865
        %v1874 = vadd.f32 %v1854, %v1866
        %v1875 = vadd.f32 %v1856, %v1867
        %v1876 = vrot.slane %v1813, 2
        %v1877 = vrot.slane %v1815, 2
        %v1878 = vrot.slane %v1854, 2
        %v1879 = vrot.slane %v1856, 2
        %v1884 = vadd.f32 %v1872, %v1876
        %v1885 = vadd.f32 %v1873, %v1877
        %v1886 = vadd.f32 %v1874, %v1878
        %v1887 = vadd.f32 %v1875, %v1879
        %v1888 = vadd.f32 %v1148, %v1884
        %v1889 = vadd.f32 %v1149, %v1885
        %v1890 = vadd.f32 %v1150, %v1886
        %v1891 = vadd.f32 %v1151, %v1887
        %v1892 = vld [vmem:[%s394] sm:$0xf]
        %v1897 = vcombine.low %v1888, %v1889
        %v1898 = vcombine.low %v1890, %v1891
        %v1900 = vunpack.c.l.s4 1966171168
        %v1901 = vunpack.c.0.s8 %v1900
        %v1902 = vlaneseq
        %v1903 = vshrl.u32 %v1902, 7
        %v1904 = vsub.s32 %v1901, %v1903
        %v1905 = vrot.slane %v1897, %v1904
        %v1907 = vunpack.c.l.s4 1966171168
        %v1908 = vunpack.c.0.s8 %v1907
        %v1909 = vlaneseq
        %v1910 = vshrl.u32 %v1909, 7
        %v1911 = vsub.s32 %v1908, %v1910
        %v1912 = vrot.slane %v1898, %v1911
        %v1913 = vcombine.low %v1905, %v1912
        %v1915 = vunpack.c.l.s4 1966171168
        %v1916 = vunpack.c.0.s8 %v1915
        %v1917 = vlaneseq
        %v1918 = vshrl.u32 %v1917, 7
        %v1919 = vsub.s32 %v1916, %v1918
        %v1920 = vrot.slane %v1913, %v1919
        %v1922 = vadd.f32 %v1892, %v1920
        %v1923 = vlaneseq
        %vm1924 = vcmp.ge.s32.totalorder %v1923, 0
        %vm1925 = vcmp.lt.s32.totalorder %v1923, 512
        %vm1926 = vmand %vm1924, %vm1925
        %1927 = vst.msk [vmem:[%s394] sm:$0xf] %vm1926, %v1922
        // Predicated region
        $region65: #{tpu_custom_call.1} parent=43 // pred_check
          %p1928 = pneg %p404
        $region66: #{tpu_custom_call.1} parent=43 // pred_check_branch
          %1930 = sbr.rel (%p1928) target = $region68
        $region67: #{tpu_custom_call.1} parent=43 // pred_region
          %v1931 = vld [vmem:[%s401] sm:$0xf]
          %v1932 = vld [vmem:[%s343] sm:$0xf]
          %v1933 = vld [vmem:[%s394] sm:$0xf]
          %v1934 = vmul.f32 %v1932, %v1933
          %v1935 = vadd.f32 %v1931, %v1934
          %s1936 = sld [smem:[#allocation3]]
          %v1937 = vld [vmem:[%s352] sm:$0xf]
          %v1938 = vstv %s1936
          %v1939 = vmul.f32 %v1938, %v1937
          %v1940 = vsub.f32 %v1935, %v1939
          %1941 = vst.msk [vmem:[%s394] sm:$0xf] %vm1926, %v1940
        $region68: #{tpu_custom_call.1} parent=43 // pred_fallthru
          _
        %s1942 = sand.u32 %s201, 1
        %s1943 = scalar_lea.sflag [#allocation6], %s1942
        %s1944 = sand.u32 %s201, 1
        %s1945 = smul.addr %s1944, 4
        %s1946 = scalar_lea.vmem [#allocation12], %s1945
        // Predicated region
        $region69: #{tpu_custom_call.1} parent=43 // pred_check
          %p1947 = pneg %p211
        $region70: #{tpu_custom_call.1} parent=43 // pred_check_branch
          %1949 = sbr.rel (%p1947) target = $region72
        $region71: #{tpu_custom_call.1} parent=43 // pred_region
          %s1950 = smul.u32 4, %s32
          %s1952 = ssub.s32 64, 64
          %1953 = vsyncadd %s1943, %s1952
          %s1954 = smul.addr %s1950, 16
          %s1955 = scalar_lea.hbm %s6, %s1954
          %s1957 = sshll.u32 %s1946, 4
          %s1958 = int_to_ptr.vmem [resolvable:$true] %s1957
          %1960 = dma.vmem_to_hbm [thread:$0]  %s1958, 64, %s1955, %s1943
        $region72: #{tpu_custom_call.1} parent=43 // pred_fallthru
          _
      $region44: #{tpu_custom_call.1} parent=5 // pred_fallthru
        _
      %p1961 = scmp.le.s32.totalorder 2, %s23
      // Predicated region
      $region73: #{tpu_custom_call.1} parent=5 // pred_check
        %p1962 = pneg %p1961
      $region74: #{tpu_custom_call.1} parent=5 // pred_check_branch
        %1964 = sbr.rel (%p1962) target = $region76
      $region75: #{tpu_custom_call.1} parent=5 // pred_region
        %s1965 = ssub.s32 %s23, 2
        // Predicated region
        $region77: #{tpu_custom_call.1} parent=75 // pred_check
          %p1966 = pneg %p217
        $region78: #{tpu_custom_call.1} parent=75 // pred_check_branch
          %1968 = sbr.rel (%p1966) target = $region80
        $region79: #{tpu_custom_call.1} parent=75 // pred_region
          %s1969 = sand.u32 %s202, 1
          %s1970 = scalar_lea.sflag [#allocation6], %s1969
          %s1971 = sand.u32 %s202, 1
          %s1972 = smul.addr %s1971, 4
          %s1973 = scalar_lea.vmem [#allocation12], %s1972
          %1974 = dma.done %s1970, 64
        $region80: #{tpu_custom_call.1} parent=75 // pred_fallthru
          _
      $region76: #{tpu_custom_call.1} parent=5 // pred_fallthru
        _
    $region6: #{tpu_custom_call.1} parent=1 // loop_footer
      %s27 = sadd.s32 1, %s23
    $region7: #{tpu_custom_call.1} parent=1 // loop_footer_branch
      %22 = sbr.rel target = $region3
    $region8: #{tpu_custom_call.1} parent=1 // loop_exit
      _
    %1975 = vsyncpa [#allocation5], 1
    %s1976 = scalar_lea.sflag [#allocation5], 1
    %1977 = vsyncpa %s1976, 1
    %1978 = vsyncpa [#allocation8], 1
    %s1979 = scalar_lea.sflag [#allocation8], 1
    %1980 = vsyncpa %s1979, 1
    %1981 = vsyncpa [#allocation11], 1
    %s1982 = scalar_lea.sflag [#allocation11], 1
    %1983 = vsyncpa %s1982, 1
    %1984 = vsyncpa [#allocation6], 1
    %s1985 = scalar_lea.sflag [#allocation6], 1
    %1986 = vsyncpa %s1985, 1

</llo_original>
